<compile_context>
chip_gen: v7x
topology: tpu7x:2x2x1
jax: 0.10.0
libtpu: 0.0.40
codegen_flags: <defaults>
</compile_context>

<pallas_src>
import functools

import jax
import jax.numpy as jnp
from jax.experimental import pallas as pl
from jax.experimental.pallas import tpu as pltpu

DROPOUT_P = 0.5  # nn.Dropout(0.5), training-mode (inverted) dropout


def _round_up(n, m):
    return ((n + m - 1) // m) * m


def _hash_u32(x):
    """splitmix32-style finalizer: cheap stateless per-element PRNG (uint32 -> uint32)."""
    x = x * jnp.uint32(0x9E3779B9)
    x = x ^ jax.lax.shift_right_logical(x, jnp.uint32(16))
    x = x * jnp.uint32(0x85EBCA6B)
    x = x ^ jax.lax.shift_right_logical(x, jnp.uint32(13))
    x = x * jnp.uint32(0xC2B2AE35)
    x = x ^ jax.lax.shift_right_logical(x, jnp.uint32(16))
    return x


def autoencoder_kernel(seed_ref, x_ref, w1_ref, b1_ref, w2_ref, b2_ref, out_ref,
                       *, apply_dropout: bool):
    tb, d = x_ref.shape
    x = x_ref[...].astype(jnp.float32)

    if apply_dropout:
        # --- Dropout(p=0.5), training semantics. Stateless counter-based PRNG:
        # hash(seed, global element index) so every grid tile gets an independent mask.
        tile = pl.program_id(0).astype(jnp.uint32)
        row = jax.lax.broadcasted_iota(jnp.uint32, (tb, d), 0)
        col = jax.lax.broadcasted_iota(jnp.uint32, (tb, d), 1)
        gidx = (tile * jnp.uint32(tb) + row) * jnp.uint32(d) + col
        seed_u32 = seed_ref[0].astype(jnp.uint32)
        bits = _hash_u32(gidx ^ (seed_u32 * jnp.uint32(0x9E3779B9)) ^ jnp.uint32(0x85EBCA6B))
        # MSB of the hash -> Bernoulli(keep_prob = 1 - p = 0.5); apply as one multiply.
        keep = (bits < jnp.uint32(0x80000000)).astype(jnp.float32)
        x = x * (keep * jnp.float32(1.0 / (1.0 - DROPOUT_P)))

    # --- encoder: Linear(input_size -> hidden_size) + Sigmoid ---
    # bf16 MXU operands, f32 accumulation; elementwise path stays f32.
    h = jnp.dot(x.astype(jnp.bfloat16), w1_ref[...].astype(jnp.bfloat16),
                preferred_element_type=jnp.float32)
    h = jax.nn.sigmoid(h + b1_ref[...])

    # --- decoder: Linear(hidden_size -> input_size) + Sigmoid ---
    y = jnp.dot(h.astype(jnp.bfloat16), w2_ref[...].astype(jnp.bfloat16),
                preferred_element_type=jnp.float32)
    out_ref[...] = jax.nn.sigmoid(y + b2_ref[...]).astype(out_ref.dtype)


def autoencoder_forward(x, w1, b1, w2, b2, seed, *, training=True, block_b=256):
    """x: (B, input_size) f32. seed: (1,) int32. Returns (B, input_size) f32."""
    B, D = x.shape
    H = w1.shape[1]
    assert w1.shape == (D, H) and w2.shape == (H, D)
    assert b1.shape == (1, H) and b2.shape == (1, D)

    # Batch tile: multiple of 8 (f32 sublane); pad B up to a whole number of tiles so
    # the (TB, D) BlockSpec is always full.  Weights/biases stay VMEM-resident across
    # the grid (index_map -> (0, 0)), only x/out tiles stream (double-buffered).
    TB = min(block_b, _round_up(B, 8))
    Bp = _round_up(B, TB)
    if Bp != B:
        x = jnp.pad(x, ((0, Bp - B), (0, 0)))
    num_tiles = Bp // TB

    grid_spec = pltpu.PrefetchScalarGridSpec(
        num_scalar_prefetch=1,            # seed lands in SMEM, visible to index_maps too
        grid=(num_tiles,),
        in_specs=[
            pl.BlockSpec((TB, D), lambda i, s: (i, 0)),   # x tile (pipelined)
            pl.BlockSpec((D, H), lambda i, s: (0, 0)),    # w1 resident
            pl.BlockSpec((1, H), lambda i, s: (0, 0)),    # b1 resident (single row)
            pl.BlockSpec((H, D), lambda i, s: (0, 0)),    # w2 resident
            pl.BlockSpec((1, D), lambda i, s: (0, 0)),    # b2 resident (single row)
        ],
        out_specs=pl.BlockSpec((TB, D), lambda i, s: (i, 0)),
    )

    # Batch tiles are independent -> "parallel" (lets v7x shard them across its 2 TCs).
    compiler_params = None
    if jax.default_backend() == "tpu":
        compiler_params = pltpu.CompilerParams(dimension_semantics=("parallel",))

    out = pl.pallas_call(
        functools.partial(autoencoder_kernel, apply_dropout=training),
        out_shape=jax.ShapeDtypeStruct((Bp, D), jnp.float32),
        grid_spec=grid_spec,
        compiler_params=compiler_params,
    )(seed, x, w1, b1, w2, b2)

    return out[:B] if Bp != B else out


if __name__ == "__main__":
    # Shapes consistent with the module: args.input_size=256, args.hidden_size=128.
    # B chosen to exercise the batch grid (2 tiles of 256 rows) and fill the MXU M dim.
    B, INPUT_SIZE, HIDDEN_SIZE = 512, 256, 128

    key = jax.random.PRNGKey(0)
    kx, k1, kb1, k2, kb2 = jax.random.split(key, 5)

    # PyTorch-style uniform(-1/sqrt(fan_in), 1/sqrt(fan_in)) init.
    lim1 = 1.0 / (INPUT_SIZE ** 0.5)
    lim2 = 1.0 / (HIDDEN_SIZE ** 0.5)
    w1 = jax.random.uniform(k1, (INPUT_SIZE, HIDDEN_SIZE), jnp.float32, -lim1, lim1)
    b1 = jax.random.uniform(kb1, (1, HIDDEN_SIZE), jnp.float32, -lim1, lim1)
    w2 = jax.random.uniform(k2, (HIDDEN_SIZE, INPUT_SIZE), jnp.float32, -lim2, lim2)
    b2 = jax.random.uniform(kb2, (1, INPUT_SIZE), jnp.float32, -lim2, lim2)

    x = jax.random.normal(kx, (B, INPUT_SIZE), jnp.float32)
    seed = jnp.array([1234], dtype=jnp.int32)

    out = autoencoder_forward(x, w1, b1, w2, b2, seed, training=True)
    out = jax.block_until_ready(out)

    assert out.shape == (B, INPUT_SIZE) and out.dtype == jnp.float32
    # Sigmoid output range sanity check.
    assert bool(jnp.all(out >= 0.0)) and bool(jnp.all(out <= 1.0))
    assert bool(jnp.all(jnp.isfinite(out)))
    print("KERNEL_OK")
</pallas_src>

<mosaic_0001>
module attributes {stable_mosaic.version = 11 : i64} {
  func.func @autoencoder_kernel(%arg0: i32, %arg1: memref<1xi32, #tpu.memory_space<smem>>, %arg2: memref<256x256xf32, #tpu.memory_space<vmem>>, %arg3: memref<256x128xf32, #tpu.memory_space<vmem>>, %arg4: memref<1x128xf32, #tpu.memory_space<vmem>>, %arg5: memref<128x256xf32, #tpu.memory_space<vmem>>, %arg6: memref<1x256xf32, #tpu.memory_space<vmem>>, %arg7: memref<256x256xf32, #tpu.memory_space<vmem>>) attributes {dimension_semantics = [#tpu.dimension_semantics<arbitrary>], iteration_bounds = array<i64: 2>, scalar_prefetch = 1 : i64, scratch_operands = 0 : i64, tpu.core_type = #tpu.core_type<tc>, window_params = [{transform_indices = @transform_0, window_bounds = array<i64: 256, 256>}, {pipeline_mode = #tpu.pipeline_mode<synchronous>, transform_indices = @transform_1, window_bounds = array<i64: 256, 128>}, {pipeline_mode = #tpu.pipeline_mode<synchronous>, transform_indices = @transform_2, window_bounds = array<i64: 1, 128>}, {pipeline_mode = #tpu.pipeline_mode<synchronous>, transform_indices = @transform_3, window_bounds = array<i64: 128, 256>}, {pipeline_mode = #tpu.pipeline_mode<synchronous>, transform_indices = @transform_4, window_bounds = array<i64: 1, 256>}, {transform_indices = @transform_5, window_bounds = array<i64: 256, 256>}]} {
    %c0 = arith.constant 0 : index
    %c0_0 = arith.constant 0 : index
    %0 = vector.load %arg2[%c0, %c0_0] : memref<256x256xf32, #tpu.memory_space<vmem>>, vector<256x256xf32>
    %1 = tpu.iota {dimensions = array<i32: 0>} : vector<256x256xi32>
    %2 = tpu.iota {dimensions = array<i32: 1>} : vector<256x256xi32>
    %c256_i32 = arith.constant 256 : i32
    %3 = arith.muli %arg0, %c256_i32 : i32
    %4 = vector.broadcast %3 : i32 to vector<256x256xi32>
    %5 = arith.addi %4, %1 : vector<256x256xi32>
    %c256_i32_1 = arith.constant 256 : i32
    %6 = vector.broadcast %c256_i32_1 : i32 to vector<256x256xi32>
    %7 = arith.muli %5, %6 : vector<256x256xi32>
    %8 = arith.addi %7, %2 : vector<256x256xi32>
    %c0_2 = arith.constant 0 : index
    %9 = memref.load %arg1[%c0_2] : memref<1xi32, #tpu.memory_space<smem>>
    %c-1640531527_i32 = arith.constant -1640531527 : i32
    %10 = arith.muli %9, %c-1640531527_i32 : i32
    %11 = vector.broadcast %10 : i32 to vector<256x256xi32>
    %12 = arith.xori %8, %11 : vector<256x256xi32>
    %c-2048144789_i32 = arith.constant -2048144789 : i32
    %13 = vector.broadcast %c-2048144789_i32 : i32 to vector<256x256xi32>
    %14 = arith.xori %12, %13 : vector<256x256xi32>
    %c-1640531527_i32_3 = arith.constant -1640531527 : i32
    %15 = vector.broadcast %c-1640531527_i32_3 : i32 to vector<256x256xi32>
    %16 = arith.muli %14, %15 : vector<256x256xi32>
    %c16_i32 = arith.constant 16 : i32
    %17 = vector.broadcast %c16_i32 : i32 to vector<256x256xi32>
    %18 = arith.shrui %16, %17 : vector<256x256xi32>
    %19 = arith.xori %16, %18 : vector<256x256xi32>
    %c-2048144789_i32_4 = arith.constant -2048144789 : i32
    %20 = vector.broadcast %c-2048144789_i32_4 : i32 to vector<256x256xi32>
    %21 = arith.muli %19, %20 : vector<256x256xi32>
    %c13_i32 = arith.constant 13 : i32
    %22 = vector.broadcast %c13_i32 : i32 to vector<256x256xi32>
    %23 = arith.shrui %21, %22 : vector<256x256xi32>
    %24 = arith.xori %21, %23 : vector<256x256xi32>
    %c-1028477387_i32 = arith.constant -1028477387 : i32
    %25 = vector.broadcast %c-1028477387_i32 : i32 to vector<256x256xi32>
    %26 = arith.muli %24, %25 : vector<256x256xi32>
    %c16_i32_5 = arith.constant 16 : i32
    %27 = vector.broadcast %c16_i32_5 : i32 to vector<256x256xi32>
    %28 = arith.shrui %26, %27 : vector<256x256xi32>
    %29 = arith.xori %26, %28 : vector<256x256xi32>
    %c-2147483648_i32 = arith.constant -2147483648 : i32
    %30 = vector.broadcast %c-2147483648_i32 : i32 to vector<256x256xi32>
    %31 = arith.cmpi ult, %29, %30 : vector<256x256xi32>
    %32 = arith.extui %31 : vector<256x256xi1> to vector<256x256xi32>
    %33 = arith.sitofp %32 : vector<256x256xi32> to vector<256x256xf32>
    %cst = arith.constant 2.000000e+00 : f32
    %34 = vector.broadcast %cst : f32 to vector<256x256xf32>
    %35 = arith.mulf %33, %34 : vector<256x256xf32>
    %36 = arith.mulf %0, %35 : vector<256x256xf32>
    %37 = arith.truncf %36 : vector<256x256xf32> to vector<256x256xbf16>
    %c0_6 = arith.constant 0 : index
    %c0_7 = arith.constant 0 : index
    %38 = vector.load %arg3[%c0_6, %c0_7] : memref<256x128xf32, #tpu.memory_space<vmem>>, vector<256x128xf32>
    %39 = arith.truncf %38 : vector<256x128xf32> to vector<256x128xbf16>
    %cst_8 = arith.constant dense<0.000000e+00> : vector<256x128xf32>
    %40 = tpu.matmul %37, %39, %cst_8 {dimension_numbers = #tpu.dot_dimension_numbers<[1], [0], [0], [1], [0, 0, 1, 1], [], []>} : vector<256x256xbf16>, vector<256x128xbf16>, vector<256x128xf32> -> vector<256x128xf32>
    %c0_9 = arith.constant 0 : index
    %c0_10 = arith.constant 0 : index
    %41 = vector.load %arg4[%c0_9, %c0_10] : memref<1x128xf32, #tpu.memory_space<vmem>>, vector<1x128xf32>
    %42 = vector.broadcast %41 : vector<1x128xf32> to vector<256x128xf32>
    %43 = arith.addf %40, %42 : vector<256x128xf32>
    %44 = arith.negf %43 : vector<256x128xf32>
    %45 = math.exp %44 : vector<256x128xf32>
    %cst_11 = arith.constant 1.000000e+00 : f32
    %46 = vector.broadcast %cst_11 : f32 to vector<256x128xf32>
    %47 = arith.addf %46, %45 : vector<256x128xf32>
    %48 = arith.divf %46, %47 : vector<256x128xf32>
    %49 = arith.truncf %48 : vector<256x128xf32> to vector<256x128xbf16>
    %c0_12 = arith.constant 0 : index
    %c0_13 = arith.constant 0 : index
    %50 = vector.load %arg5[%c0_12, %c0_13] : memref<128x256xf32, #tpu.memory_space<vmem>>, vector<128x256xf32>
    %51 = arith.truncf %50 : vector<128x256xf32> to vector<128x256xbf16>
    %cst_14 = arith.constant dense<0.000000e+00> : vector<256x256xf32>
    %52 = tpu.matmul %49, %51, %cst_14 {dimension_numbers = #tpu.dot_dimension_numbers<[1], [0], [0], [1], [0, 0, 1, 1], [], []>} : vector<256x128xbf16>, vector<128x256xbf16>, vector<256x256xf32> -> vector<256x256xf32>
    %c0_15 = arith.constant 0 : index
    %c0_16 = arith.constant 0 : index
    %53 = vector.load %arg6[%c0_15, %c0_16] : memref<1x256xf32, #tpu.memory_space<vmem>>, vector<1x256xf32>
    %54 = vector.broadcast %53 : vector<1x256xf32> to vector<256x256xf32>
    %55 = arith.addf %52, %54 : vector<256x256xf32>
    %56 = arith.negf %55 : vector<256x256xf32>
    %57 = math.exp %56 : vector<256x256xf32>
    %cst_17 = arith.constant 1.000000e+00 : f32
    %58 = vector.broadcast %cst_17 : f32 to vector<256x256xf32>
    %59 = arith.addf %58, %57 : vector<256x256xf32>
    %60 = arith.divf %58, %59 : vector<256x256xf32>
    %c0_18 = arith.constant 0 : index
    %c0_19 = arith.constant 0 : index
    %61 = vector.load %arg7[%c0_18, %c0_19] : memref<256x256xf32, #tpu.memory_space<vmem>>, vector<256x256xf32>
    tpu.vector_store %arg7[%c0_18, %c0_19], %60 {strides = array<i32>} : memref<256x256xf32, #tpu.memory_space<vmem>>, vector<256x256xf32>,
    return
  }
  func.func @transform_0(%arg0: i32, %arg1: memref<1xi32, #tpu.memory_space<smem>>) -> (i32, i32) {
    %c0_i32 = arith.constant 0 : i32
    %c0_i32_0 = arith.constant 0 : i32
    return %arg0, %c0_i32 : i32, i32
  }
  func.func @transform_1(%arg0: i32, %arg1: memref<1xi32, #tpu.memory_space<smem>>) -> (i32, i32) {
    %c0_i32 = arith.constant 0 : i32
    %c0_i32_0 = arith.constant 0 : i32
    %c0_i32_1 = arith.constant 0 : i32
    return %c0_i32, %c0_i32_0 : i32, i32
  }
  func.func @transform_2(%arg0: i32, %arg1: memref<1xi32, #tpu.memory_space<smem>>) -> (i32, i32) {
    %c0_i32 = arith.constant 0 : i32
    %c0_i32_0 = arith.constant 0 : i32
    %c0_i32_1 = arith.constant 0 : i32
    return %c0_i32, %c0_i32_0 : i32, i32
  }
  func.func @transform_3(%arg0: i32, %arg1: memref<1xi32, #tpu.memory_space<smem>>) -> (i32, i32) {
    %c0_i32 = arith.constant 0 : i32
    %c0_i32_0 = arith.constant 0 : i32
    %c0_i32_1 = arith.constant 0 : i32
    return %c0_i32, %c0_i32_0 : i32, i32
  }
  func.func @transform_4(%arg0: i32, %arg1: memref<1xi32, #tpu.memory_space<smem>>) -> (i32, i32) {
    %c0_i32 = arith.constant 0 : i32
    %c0_i32_0 = arith.constant 0 : i32
    %c0_i32_1 = arith.constant 0 : i32
    return %c0_i32, %c0_i32_0 : i32, i32
  }
  func.func @transform_5(%arg0: i32, %arg1: memref<1xi32, #tpu.memory_space<smem>>) -> (i32, i32) {
    %c0_i32 = arith.constant 0 : i32
    %c0_i32_0 = arith.constant 0 : i32
    return %arg0, %c0_i32 : i32, i32
  }
}

</mosaic_0001>

<llo_original>
// kernel: tpu_custom_call.1
$region0: #{tpu_custom_call.1}
  #allocation0 [shape = 'u32[]', space=smem, size = 0x4, offset = 0x4, fixed_abs, tag = 'smem constant byte address 0x4 - core index']
  #allocation1 [shape = 'u32[144,128]{1,0:T(1,128)}', space=vmem, size = 0x12000, scoped, tag = 'internal scratch']
  #allocation2 [shape = 's32[1]{0}', space=sflag, size = 0x4, scoped, tag = 'scoped memory for tpu_custom_call.1']
  #allocation3 [shape = 's32[1]{0:T(128)S(6)}', space=smem, size = 0x200, scoped, tag = 'prefetched SMEM operand 0']
  %s0 = inlined_call_operand.<no memory space> [shape: s32[1], index: 0, kind: input, shape index: {}]
  %s1 = inlined_call_operand.hbm [shape: f32[512,256], index: 1, kind: input, shape index: {}]
  %s2 = inlined_call_operand.hbm [shape: f32[256,128], index: 2, kind: input, shape index: {}]
  %s3 = inlined_call_operand.vmem [shape: f32[1,128], index: 3, kind: input, shape index: {}]
  %s4 = inlined_call_operand.hbm [shape: f32[128,256], index: 4, kind: input, shape index: {}]
  %s5 = inlined_call_operand.vmem [shape: f32[1,256], index: 5, kind: input, shape index: {}]
  %s6 = inlined_call_operand.hbm [shape: f32[512,256], index: 6, kind: output, shape index: {}]
  %s7 = sld [smem:[#allocation0]]
  $region65: #{tpu_custom_call.1} parent=0
    _
  %s9 = ssub.s32 1, %s7
  %s10 = scalar_select 0, %s9, %s7
  %11 = sst [smem:[#allocation3]] %s0
  $region1: #{tpu_custom_call.1} parent=0
    #allocation4 [shape = 'u8[524288]{0}', space=vmem, size = 0x80000, scoped, tag = 'input window, operand 1']
    #allocation5 [shape = 's32[2]{0}', space=sflag, size = 0x8, scoped, tag = 'scoped memory for tpu_custom_call.1']
    #allocation6 [shape = 's32[2]{0}', space=sflag, size = 0x8, scoped, tag = 'scoped memory for tpu_custom_call.1']
    #allocation7 [shape = 'u8[131072]{0}', space=vmem, size = 0x20000, scoped, tag = 'input window, operand 2, single buffered']
    #allocation8 [shape = 's32[1]{0}', space=sflag, size = 0x4, scoped, tag = 'scoped memory for tpu_custom_call.1']
    #allocation9 [shape = 'u8[131072]{0}', space=vmem, size = 0x20000, scoped, tag = 'input window, operand 4, single buffered']
    #allocation10 [shape = 'u8[524288]{0}', space=vmem, size = 0x80000, scoped, tag = 'output window, operand 0']
    %12 = vsyncpa [#allocation5], 0
    %s13 = scalar_lea.sflag [#allocation5], 1
    %14 = vsyncpa %s13, 0
    %15 = vsyncpa [#allocation8], 0
    %16 = vsyncpa [#allocation6], 0
    %s17 = scalar_lea.sflag [#allocation6], 1
    %18 = vsyncpa %s17, 0
    loop: start=0, step=1, limit=4
    $region2: #{tpu_custom_call.1} parent=1 // loop_pre_header
      _
    $region3: #{tpu_custom_call.1} parent=1 // loop_header
      %s20 = sphi 0, %s24
      %p21 = scmp.ge.s32.totalorder %s20, 4
      %s30 = sphi 0, %s32
      %s33 = sphi 0, %s30
      %s34 = sphi 0, %s33
      %s50 = sphi 0, %s34
      %s54 = sphi 0, %s54
      %s56 = sphi 0, %s54
      %s57 = sphi 0, %s56
      %s71 = sphi 0, %s57
      %s75 = sphi 0, %s75
      %s77 = sphi 0, %s75
      %s78 = sphi 0, %s77
      %s92 = sphi 0, %s78
      %s96 = sphi 0, %s96
      %s98 = sphi 0, %s96
      %s99 = sphi 0, %s98
      %s113 = sphi 0, %s99
      %s117 = sphi 0, %s117
      %s119 = sphi 0, %s117
      %s120 = sphi 0, %s119
      %s134 = sphi 0, %s120
      %s140 = sphi 0, %s142
      %s143 = sphi 0, %s140
      %s144 = sphi 0, %s143
      %s160 = sphi 0, %s144
    $region4: #{tpu_custom_call.1} parent=1 // loop_header_branch
      %23 = sbr.rel (%p21) target = $region8
    $region5: #{tpu_custom_call.1} parent=1 // loop_body
      %s25 = ssub.s32 %s20, 1
      %s26 = ssub.s32 %s20, 2
      %s27 = sadd.s32 %s20, 1
      %s28 = ssub.s32 %s20, %s27
      %p29 = scmp.eq.s32.totalorder %s28, 0
      %s31 = sadd.s32 %s30, 1
      %s32 = scalar_select %p29, %s30, %s31
      %p35 = pneg %p29
      %p36 = scmp.eq.s32.totalorder %s20, 1
      %p37 = por %p35, %p36
      %p38 = scmp.ne.s32.totalorder %s30, %s33
      %p39 = scmp.eq.s32.totalorder %s20, 0
      %p40 = por %p38, %p39
      %p41 = scmp.ne.s32.totalorder %s30, %s33
      %p42 = scmp.eq.s32.totalorder %s25, 1
      %p43 = por %p41, %p42
      %p44 = scmp.ne.s32.totalorder %s33, %s34
      %p45 = scmp.eq.s32.totalorder %s25, 0
      %p46 = por %p44, %p45
      %p47 = scmp.ne.s32.totalorder %s33, %s34
      %p48 = scmp.eq.s32.totalorder %s26, 1
      %p49 = por %p47, %p48
      %p51 = scmp.ne.s32.totalorder %s34, %s50
      %p52 = scmp.eq.s32.totalorder %s26, 0
      %p53 = por %p51, %p52
      %s55 = sadd.s32 %s54, 1
      %p58 = scmp.eq.s32.totalorder %s20, 1
      %p59 = scmp.ne.s32.totalorder %s54, %s56
      %p60 = scmp.eq.s32.totalorder %s20, 0
      %p61 = por %p59, %p60
      %p62 = scmp.ne.s32.totalorder %s54, %s56
      %p63 = scmp.eq.s32.totalorder %s25, 1
      %p64 = por %p62, %p63
      %p65 = scmp.ne.s32.totalorder %s56, %s57
      %p66 = scmp.eq.s32.totalorder %s25, 0
      %p67 = por %p65, %p66
      %p68 = scmp.ne.s32.totalorder %s56, %s57
      %p69 = scmp.eq.s32.totalorder %s26, 1
      %p70 = por %p68, %p69
      %p72 = scmp.ne.s32.totalorder %s57, %s71
      %p73 = scmp.eq.s32.totalorder %s26, 0
      %p74 = por %p72, %p73
      %s76 = sadd.s32 %s75, 1
      %p79 = scmp.eq.s32.totalorder %s20, 1
      %p80 = scmp.ne.s32.totalorder %s75, %s77
      %p81 = scmp.eq.s32.totalorder %s20, 0
      %p82 = por %p80, %p81
      %p83 = scmp.ne.s32.totalorder %s75, %s77
      %p84 = scmp.eq.s32.totalorder %s25, 1
      %p85 = por %p83, %p84
      %p86 = scmp.ne.s32.totalorder %s77, %s78
      %p87 = scmp.eq.s32.totalorder %s25, 0
      %p88 = por %p86, %p87
      %p89 = scmp.ne.s32.totalorder %s77, %s78
      %p90 = scmp.eq.s32.totalorder %s26, 1
      %p91 = por %p89, %p90
      %p93 = scmp.ne.s32.totalorder %s78, %s92
      %p94 = scmp.eq.s32.totalorder %s26, 0
      %p95 = por %p93, %p94
      %s97 = sadd.s32 %s96, 1
      %p100 = scmp.eq.s32.totalorder %s20, 1
      %p101 = scmp.ne.s32.totalorder %s96, %s98
      %p102 = scmp.eq.s32.totalorder %s20, 0
      %p103 = por %p101, %p102
      %p104 = scmp.ne.s32.totalorder %s96, %s98
      %p105 = scmp.eq.s32.totalorder %s25, 1
      %p106 = por %p104, %p105
      %p107 = scmp.ne.s32.totalorder %s98, %s99
      %p108 = scmp.eq.s32.totalorder %s25, 0
      %p109 = por %p107, %p108
      %p110 = scmp.ne.s32.totalorder %s98, %s99
      %p111 = scmp.eq.s32.totalorder %s26, 1
      %p112 = por %p110, %p111
      %p114 = scmp.ne.s32.totalorder %s99, %s113
      %p115 = scmp.eq.s32.totalorder %s26, 0
      %p116 = por %p114, %p115
      %s118 = sadd.s32 %s117, 1
      %p121 = scmp.eq.s32.totalorder %s20, 1
      %p122 = scmp.ne.s32.totalorder %s117, %s119
      %p123 = scmp.eq.s32.totalorder %s20, 0
      %p124 = por %p122, %p123
      %p125 = scmp.ne.s32.totalorder %s117, %s119
      %p126 = scmp.eq.s32.totalorder %s25, 1
      %p127 = por %p125, %p126
      %p128 = scmp.ne.s32.totalorder %s119, %s120
      %p129 = scmp.eq.s32.totalorder %s25, 0
      %p130 = por %p128, %p129
      %p131 = scmp.ne.s32.totalorder %s119, %s120
      %p132 = scmp.eq.s32.totalorder %s26, 1
      %p133 = por %p131, %p132
      %p135 = scmp.ne.s32.totalorder %s120, %s134
      %p136 = scmp.eq.s32.totalorder %s26, 0
      %p137 = por %p135, %p136
      %s138 = ssub.s32 %s20, %s27
      %p139 = scmp.eq.s32.totalorder %s138, 0
      %s141 = sadd.s32 %s140, 1
      %s142 = scalar_select %p139, %s140, %s141
      %p145 = pneg %p139
      %p146 = scmp.eq.s32.totalorder %s20, 1
      %p147 = por %p145, %p146
      %p148 = scmp.ne.s32.totalorder %s140, %s143
      %p149 = scmp.eq.s32.totalorder %s20, 0
      %p150 = por %p148, %p149
      %p151 = scmp.ne.s32.totalorder %s140, %s143
      %p152 = scmp.eq.s32.totalorder %s25, 1
      %p153 = por %p151, %p152
      %p154 = scmp.ne.s32.totalorder %s143, %s144
      %p155 = scmp.eq.s32.totalorder %s25, 0
      %p156 = por %p154, %p155
      %p157 = scmp.ne.s32.totalorder %s143, %s144
      %p158 = scmp.eq.s32.totalorder %s26, 1
      %p159 = por %p157, %p158
      %p161 = scmp.ne.s32.totalorder %s144, %s160
      %p162 = scmp.eq.s32.totalorder %s26, 0
      %p163 = por %p161, %p162
      %p164 = scmp.le.s32.totalorder 1, %s20
      %p165 = scmp.lt.s32.totalorder %s20, 3
      %p166 = pnand %p164, %p165
      %p167 = pneg %p166
      // Predicated region
      $region9: #{tpu_custom_call.1} parent=5 // pred_check
        _
      $region10: #{tpu_custom_call.1} parent=5 // pred_check_branch
        %169 = sbr.rel (%p166) target = $region12
      $region11: #{tpu_custom_call.1} parent=5 // pred_region
        %s170 = ssub.s32 %s20, 1
        // Predicated region
        $region13: #{tpu_custom_call.1} parent=11 // pred_check
          %p171 = pneg %p67
        $region14: #{tpu_custom_call.1} parent=11 // pred_check_branch
          %173 = sbr.rel (%p171) target = $region16
        $region15: #{tpu_custom_call.1} parent=11 // pred_region
          %s175 = ssub.s32 4096, 4096
          %176 = vsyncadd [#allocation8], %s175
          %s177 = sshll.u32 [#allocation7], 4
          %s178 = int_to_ptr.vmem [resolvable:$true] %s177
          %183 = dma.hbm_to_vmem [thread:$0]  %s2, 4096, %s178, [#allocation8], 128, 128, 8
        $region16: #{tpu_custom_call.1} parent=11 // pred_fallthru
          _
        // Predicated region
        $region17: #{tpu_custom_call.1} parent=11 // pred_check
          %p184 = pneg %p88
        $region18: #{tpu_custom_call.1} parent=11 // pred_check_branch
          %186 = sbr.rel (%p184) target = $region20
        $region19: #{tpu_custom_call.1} parent=11 // pred_region
          _
        $region20: #{tpu_custom_call.1} parent=11 // pred_fallthru
          _
        // Predicated region
        $region21: #{tpu_custom_call.1} parent=11 // pred_check
          %p187 = pneg %p109
        $region22: #{tpu_custom_call.1} parent=11 // pred_check_branch
          %189 = sbr.rel (%p187) target = $region24
        $region23: #{tpu_custom_call.1} parent=11 // pred_region
          %s191 = ssub.s32 4096, 4096
          %192 = vsyncadd [#allocation8], %s191
          %s193 = sshll.u32 [#allocation9], 4
          %s194 = int_to_ptr.vmem [resolvable:$true] %s193
          %199 = dma.hbm_to_vmem [thread:$0]  %s4, 4096, %s194, [#allocation8], 256, 256, 16
        $region24: #{tpu_custom_call.1} parent=11 // pred_fallthru
          _
        // Predicated region
        $region25: #{tpu_custom_call.1} parent=11 // pred_check
          %p200 = pneg %p130
        $region26: #{tpu_custom_call.1} parent=11 // pred_check_branch
          %202 = sbr.rel (%p200) target = $region28
        $region27: #{tpu_custom_call.1} parent=11 // pred_region
          _
        $region28: #{tpu_custom_call.1} parent=11 // pred_fallthru
          _
      $region12: #{tpu_custom_call.1} parent=5 // pred_fallthru
        _
      %p203 = scmp.lt.s32.totalorder %s20, 2
      // Predicated region
      $region29: #{tpu_custom_call.1} parent=5 // pred_check
        %p204 = pneg %p203
      $region30: #{tpu_custom_call.1} parent=5 // pred_check_branch
        %206 = sbr.rel (%p204) target = $region32
      $region31: #{tpu_custom_call.1} parent=5 // pred_region
        // Predicated region
        $region33: #{tpu_custom_call.1} parent=31 // pred_check
          %p207 = pneg %p40
        $region34: #{tpu_custom_call.1} parent=31 // pred_check_branch
          %209 = sbr.rel (%p207) target = $region36
        $region35: #{tpu_custom_call.1} parent=31 // pred_region
          %s210 = sand.u32 %s30, 1
          %s211 = scalar_lea.sflag [#allocation5], %s210
          %s212 = sand.u32 %s30, 1
          %s213 = smul.addr %s212, 512
          %s214 = scalar_lea.vmem [#allocation4], %s213
          %s215 = smul.u32 32, %s20
          %s217 = ssub.s32 8192, 8192
          %218 = vsyncadd %s211, %s217
          %s219 = smul.addr %s215, 2
          %s220 = smul.addr %s219, 128
          %s221 = scalar_lea.hbm %s1, %s220
          %s222 = sshll.u32 %s214, 4
          %s223 = int_to_ptr.vmem [resolvable:$true] %s222
          %228 = dma.hbm_to_vmem [thread:$0]  %s221, 8192, %s223, %s211, 256, 256, 16
        $region36: #{tpu_custom_call.1} parent=31 // pred_fallthru
          _
      $region32: #{tpu_custom_call.1} parent=5 // pred_fallthru
        _
      %p229 = scmp.le.s32.totalorder 1, %s20
      %p230 = scmp.lt.s32.totalorder %s20, 3
      %p231 = pnand %p229, %p230
      %p232 = pneg %p231
      // Predicated region
      $region37: #{tpu_custom_call.1} parent=5 // pred_check
        _
      $region38: #{tpu_custom_call.1} parent=5 // pred_check_branch
        %234 = sbr.rel (%p231) target = $region40
      $region39: #{tpu_custom_call.1} parent=5 // pred_region
        %s235 = ssub.s32 %s20, 1
        %s236 = sand.u32 %s33, 1
        %s237 = scalar_lea.sflag [#allocation5], %s236
        %s238 = sand.u32 %s33, 1
        %s239 = smul.addr %s238, 512
        %s240 = scalar_lea.vmem [#allocation4], %s239
        // Predicated region
        $region41: #{tpu_custom_call.1} parent=39 // pred_check
          %p241 = pneg %p46
        $region42: #{tpu_custom_call.1} parent=39 // pred_check_branch
          %243 = sbr.rel (%p241) target = $region44
        $region43: #{tpu_custom_call.1} parent=39 // pred_region
          %244 = dma.done %s237, 8192
        $region44: #{tpu_custom_call.1} parent=39 // pred_fallthru
          _
        // Predicated region
        $region45: #{tpu_custom_call.1} parent=39 // pred_check
          %p245 = pneg %p67
        $region46: #{tpu_custom_call.1} parent=39 // pred_check_branch
          %247 = sbr.rel (%p245) target = $region48
        $region47: #{tpu_custom_call.1} parent=39 // pred_region
          %248 = dma.done [#allocation8], 4096
        $region48: #{tpu_custom_call.1} parent=39 // pred_fallthru
          _
        // Predicated region
        $region49: #{tpu_custom_call.1} parent=39 // pred_check
          %p249 = pneg %p109
        $region50: #{tpu_custom_call.1} parent=39 // pred_check_branch
          %251 = sbr.rel (%p249) target = $region52
        $region51: #{tpu_custom_call.1} parent=39 // pred_region
          %252 = dma.done [#allocation8], 4096
        $region52: #{tpu_custom_call.1} parent=39 // pred_fallthru
          _
        %s253 = sand.u32 %s33, 1
        %s254 = scalar_lea.sflag [#allocation5], %s253
        %s255 = sand.u32 %s33, 1
        %s256 = smul.addr %s255, 512
        %s257 = scalar_lea.vmem [#allocation4], %s256
        %p258 = pneg %p46
        %p259 = pneg %p43
        %p260 = pneg %p67
        %p261 = pneg %p64
        %p262 = pneg %p88
        %p263 = pneg %p85
        %p264 = pneg %p109
        %p265 = pneg %p106
        %p266 = pneg %p130
        %p267 = pneg %p127
        %p268 = pneg %p156
        %p269 = pneg %p153
        %s270 = sand.u32 %s143, 1
        %s271 = scalar_lea.sflag [#allocation6], %s270
        %s272 = sand.u32 %s143, 1
        %s273 = smul.addr %s272, 512
        %s274 = scalar_lea.vmem [#allocation10], %s273
        %s275 = smul.u32 32, %s25
        %s276 = smul.u32 32, %s25
        %v278 = vld [vmem:[%s240] sm:$0xff]
        %v279 = vld [vmem:[%s240 + $0x8] sm:$0xff]
        %v280 = vld [vmem:[%s240 + $0x10] sm:$0xff]
        %v281 = vld [vmem:[%s240 + $0x18] sm:$0xff]
        %v282 = vld [vmem:[%s240 + $0x20] sm:$0xff]
        %v283 = vld [vmem:[%s240 + $0x28] sm:$0xff]
        %v284 = vld [vmem:[%s240 + $0x30] sm:$0xff]
        %v285 = vld [vmem:[%s240 + $0x38] sm:$0xff]
        %v286 = vld [vmem:[%s240 + $0x40] sm:$0xff]
        %v287 = vld [vmem:[%s240 + $0x48] sm:$0xff]
        %v288 = vld [vmem:[%s240 + $0x50] sm:$0xff]
        %v289 = vld [vmem:[%s240 + $0x58] sm:$0xff]
        %v290 = vld [vmem:[%s240 + $0x60] sm:$0xff]
        %v291 = vld [vmem:[%s240 + $0x68] sm:$0xff]
        %v292 = vld [vmem:[%s240 + $0x70] sm:$0xff]
        %v293 = vld [vmem:[%s240 + $0x78] sm:$0xff]
        %v294 = vld [vmem:[%s240 + $0x80] sm:$0xff]
        %v295 = vld [vmem:[%s240 + $0x88] sm:$0xff]
        %v296 = vld [vmem:[%s240 + $0x90] sm:$0xff]
        %v297 = vld [vmem:[%s240 + $0x98] sm:$0xff]
        %v298 = vld [vmem:[%s240 + $0xa0] sm:$0xff]
        %v299 = vld [vmem:[%s240 + $0xa8] sm:$0xff]
        %v300 = vld [vmem:[%s240 + $0xb0] sm:$0xff]
        %v301 = vld [vmem:[%s240 + $0xb8] sm:$0xff]
        %v302 = vld [vmem:[%s240 + $0xc0] sm:$0xff]
        %v303 = vld [vmem:[%s240 + $0xc8] sm:$0xff]
        %v304 = vld [vmem:[%s240 + $0xd0] sm:$0xff]
        %v305 = vld [vmem:[%s240 + $0xd8] sm:$0xff]
        %v306 = vld [vmem:[%s240 + $0xe0] sm:$0xff]
        %v307 = vld [vmem:[%s240 + $0xe8] sm:$0xff]
        %v308 = vld [vmem:[%s240 + $0xf0] sm:$0xff]
        %v309 = vld [vmem:[%s240 + $0xf8] sm:$0xff]
        %v310 = vld [vmem:[%s240 + $0x100] sm:$0xff]
        %v311 = vld [vmem:[%s240 + $0x108] sm:$0xff]
        %v312 = vld [vmem:[%s240 + $0x110] sm:$0xff]
        %v313 = vld [vmem:[%s240 + $0x118] sm:$0xff]
        %v314 = vld [vmem:[%s240 + $0x120] sm:$0xff]
        %v315 = vld [vmem:[%s240 + $0x128] sm:$0xff]
        %v316 = vld [vmem:[%s240 + $0x130] sm:$0xff]
        %v317 = vld [vmem:[%s240 + $0x138] sm:$0xff]
        %v318 = vld [vmem:[%s240 + $0x140] sm:$0xff]
        %v319 = vld [vmem:[%s240 + $0x148] sm:$0xff]
        %v320 = vld [vmem:[%s240 + $0x150] sm:$0xff]
        %v321 = vld [vmem:[%s240 + $0x158] sm:$0xff]
        %v322 = vld [vmem:[%s240 + $0x160] sm:$0xff]
        %v323 = vld [vmem:[%s240 + $0x168] sm:$0xff]
        %v324 = vld [vmem:[%s240 + $0x170] sm:$0xff]
        %v325 = vld [vmem:[%s240 + $0x178] sm:$0xff]
        %v326 = vld [vmem:[%s240 + $0x180] sm:$0xff]
        %v327 = vld [vmem:[%s240 + $0x188] sm:$0xff]
        %v328 = vld [vmem:[%s240 + $0x190] sm:$0xff]
        %v329 = vld [vmem:[%s240 + $0x198] sm:$0xff]
        %v330 = vld [vmem:[%s240 + $0x1a0] sm:$0xff]
        %v331 = vld [vmem:[%s240 + $0x1a8] sm:$0xff]
        %v332 = vld [vmem:[%s240 + $0x1b0] sm:$0xff]
        %v333 = vld [vmem:[%s240 + $0x1b8] sm:$0xff]
        %v334 = vld [vmem:[%s240 + $0x1c0] sm:$0xff]
        %v335 = vld [vmem:[%s240 + $0x1c8] sm:$0xff]
        %v336 = vld [vmem:[%s240 + $0x1d0] sm:$0xff]
        %v337 = vld [vmem:[%s240 + $0x1d8] sm:$0xff]
        %v338 = vld [vmem:[%s240 + $0x1e0] sm:$0xff]
        %v339 = vld [vmem:[%s240 + $0x1e8] sm:$0xff]
        %v340 = vld [vmem:[%s240 + $0x1f0] sm:$0xff]
        %v341 = vld [vmem:[%s240 + $0x1f8] sm:$0xff]
        %v342 = vlaneseq
        %v343 = vshrl.u32 %v342, 7
        %v344 = vadd.s32 %v343, 8
        %v345 = vadd.s32 %v343, 16
        %v346 = vadd.s32 %v343, 24
        %v347 = vadd.s32 %v343, 32
        %v348 = vadd.s32 %v343, 40
        %v349 = vadd.s32 %v343, 48
        %v350 = vadd.s32 %v343, 56
        %v351 = vadd.s32 %v343, 64
        %v352 = vadd.s32 %v343, 72
        %v353 = vadd.s32 %v343, 80
        %v354 = vadd.s32 %v343, 88
        %v355 = vadd.s32 %v343, 96
        %v356 = vadd.s32 %v343, 104
        %v357 = vadd.s32 %v343, 112
        %v358 = vadd.s32 %v343, 120
        %v359 = vadd.s32 %v343, 128
        %v360 = vadd.s32 %v343, 136
        %v361 = vadd.s32 %v343, 144
        %v362 = vadd.s32 %v343, 152
        %v363 = vadd.s32 %v343, 160
        %v364 = vadd.s32 %v343, 168
        %v365 = vadd.s32 %v343, 176
        %v366 = vadd.s32 %v343, 184
        %v367 = vadd.s32 %v343, 192
        %v368 = vadd.s32 %v343, 200
        %v369 = vadd.s32 %v343, 208
        %v370 = vadd.s32 %v343, 216
        %v371 = vadd.s32 %v343, 224
        %v372 = vadd.s32 %v343, 232
        %v373 = vadd.s32 %v343, 240
        %v374 = vadd.s32 %v343, 248
        %v375 = vlaneseq
        %v376 = vand.u32 %v375, 127
        %v377 = vadd.s32 %v376, 128
        %s378 = smul.u32 %s25, 256
        %v379 = vstv %s378
        %v380 = vadd.s32 %v379, %v343
        %v381 = vadd.s32 %v379, %v344
        %v382 = vadd.s32 %v379, %v345
        %v383 = vadd.s32 %v379, %v346
        %v384 = vadd.s32 %v379, %v347
        %v385 = vadd.s32 %v379, %v348
        %v386 = vadd.s32 %v379, %v349
        %v387 = vadd.s32 %v379, %v350
        %v388 = vadd.s32 %v379, %v351
        %v389 = vadd.s32 %v379, %v352
        %v390 = vadd.s32 %v379, %v353
        %v391 = vadd.s32 %v379, %v354
        %v392 = vadd.s32 %v379, %v355
        %v393 = vadd.s32 %v379, %v356
        %v394 = vadd.s32 %v379, %v357
        %v395 = vadd.s32 %v379, %v358
        %v396 = vadd.s32 %v379, %v359
        %v397 = vadd.s32 %v379, %v360
        %v398 = vadd.s32 %v379, %v361
        %v399 = vadd.s32 %v379, %v362
        %v400 = vadd.s32 %v379, %v363
        %v401 = vadd.s32 %v379, %v364
        %v402 = vadd.s32 %v379, %v365
        %v403 = vadd.s32 %v379, %v366
        %v404 = vadd.s32 %v379, %v367
        %v405 = vadd.s32 %v379, %v368
        %v406 = vadd.s32 %v379, %v369
        %v407 = vadd.s32 %v379, %v370
        %v408 = vadd.s32 %v379, %v371
        %v409 = vadd.s32 %v379, %v372
        %v410 = vadd.s32 %v379, %v373
        %v411 = vadd.s32 %v379, %v374
        %v412 = vmul.u32 %v380, 256
        %v413 = vmul.u32 %v381, 256
        %v414 = vmul.u32 %v382, 256
        %v415 = vmul.u32 %v383, 256
        %v416 = vmul.u32 %v384, 256
        %v417 = vmul.u32 %v385, 256
        %v418 = vmul.u32 %v386, 256
        %v419 = vmul.u32 %v387, 256
        %v420 = vmul.u32 %v388, 256
        %v421 = vmul.u32 %v389, 256
        %v422 = vmul.u32 %v390, 256
        %v423 = vmul.u32 %v391, 256
        %v424 = vmul.u32 %v392, 256
        %v425 = vmul.u32 %v393, 256
        %v426 = vmul.u32 %v394, 256
        %v427 = vmul.u32 %v395, 256
        %v428 = vmul.u32 %v396, 256
        %v429 = vmul.u32 %v397, 256
        %v430 = vmul.u32 %v398, 256
        %v431 = vmul.u32 %v399, 256
        %v432 = vmul.u32 %v400, 256
        %v433 = vmul.u32 %v401, 256
        %v434 = vmul.u32 %v402, 256
        %v435 = vmul.u32 %v403, 256
        %v436 = vmul.u32 %v404, 256
        %v437 = vmul.u32 %v405, 256
        %v438 = vmul.u32 %v406, 256
        %v439 = vmul.u32 %v407, 256
        %v440 = vmul.u32 %v408, 256
        %v441 = vmul.u32 %v409, 256
        %v442 = vmul.u32 %v410, 256
        %v443 = vmul.u32 %v411, 256
        %v444 = vadd.s32 %v412, %v376
        %v445 = vadd.s32 %v412, %v377
        %v446 = vadd.s32 %v413, %v376
        %v447 = vadd.s32 %v413, %v377
        %v448 = vadd.s32 %v414, %v376
        %v449 = vadd.s32 %v414, %v377
        %v450 = vadd.s32 %v415, %v376
        %v451 = vadd.s32 %v415, %v377
        %v452 = vadd.s32 %v416, %v376
        %v453 = vadd.s32 %v416, %v377
        %v454 = vadd.s32 %v417, %v376
        %v455 = vadd.s32 %v417, %v377
        %v456 = vadd.s32 %v418, %v376
        %v457 = vadd.s32 %v418, %v377
        %v458 = vadd.s32 %v419, %v376
        %v459 = vadd.s32 %v419, %v377
        %v460 = vadd.s32 %v420, %v376
        %v461 = vadd.s32 %v420, %v377
        %v462 = vadd.s32 %v421, %v376
        %v463 = vadd.s32 %v421, %v377
        %v464 = vadd.s32 %v422, %v376
        %v465 = vadd.s32 %v422, %v377
        %v466 = vadd.s32 %v423, %v376
        %v467 = vadd.s32 %v423, %v377
        %v468 = vadd.s32 %v424, %v376
        %v469 = vadd.s32 %v424, %v377
        %v470 = vadd.s32 %v425, %v376
        %v471 = vadd.s32 %v425, %v377
        %v472 = vadd.s32 %v426, %v376
        %v473 = vadd.s32 %v426, %v377
        %v474 = vadd.s32 %v427, %v376
        %v475 = vadd.s32 %v427, %v377
        %v476 = vadd.s32 %v428, %v376
        %v477 = vadd.s32 %v428, %v377
        %v478 = vadd.s32 %v429, %v376
        %v479 = vadd.s32 %v429, %v377
        %v480 = vadd.s32 %v430, %v376
        %v481 = vadd.s32 %v430, %v377
        %v482 = vadd.s32 %v431, %v376
        %v483 = vadd.s32 %v431, %v377
        %v484 = vadd.s32 %v432, %v376
        %v485 = vadd.s32 %v432, %v377
        %v486 = vadd.s32 %v433, %v376
        %v487 = vadd.s32 %v433, %v377
        %v488 = vadd.s32 %v434, %v376
        %v489 = vadd.s32 %v434, %v377
        %v490 = vadd.s32 %v435, %v376
        %v491 = vadd.s32 %v435, %v377
        %v492 = vadd.s32 %v436, %v376
        %v493 = vadd.s32 %v436, %v377
        %v494 = vadd.s32 %v437, %v376
        %v495 = vadd.s32 %v437, %v377
        %v496 = vadd.s32 %v438, %v376
        %v497 = vadd.s32 %v438, %v377
        %v498 = vadd.s32 %v439, %v376
        %v499 = vadd.s32 %v439, %v377
        %v500 = vadd.s32 %v440, %v376
        %v501 = vadd.s32 %v440, %v377
        %v502 = vadd.s32 %v441, %v376
        %v503 = vadd.s32 %v441, %v377
        %v504 = vadd.s32 %v442, %v376
        %v505 = vadd.s32 %v442, %v377
        %v506 = vadd.s32 %v443, %v376
        %v507 = vadd.s32 %v443, %v377
        %s508 = sld [smem:[#allocation3]]
        %s509 = smul.u32 %s508, 2654435769
        %v510 = vstv %s509
        %v511 = vxor.u32 %v444, %v510
        %v512 = vxor.u32 %v445, %v510
        %v513 = vxor.u32 %v446, %v510
        %v514 = vxor.u32 %v447, %v510
        %v515 = vxor.u32 %v448, %v510
        %v516 = vxor.u32 %v449, %v510
        %v517 = vxor.u32 %v450, %v510
        %v518 = vxor.u32 %v451, %v510
        %v519 = vxor.u32 %v452, %v510
        %v520 = vxor.u32 %v453, %v510
        %v521 = vxor.u32 %v454, %v510
        %v522 = vxor.u32 %v455, %v510
        %v523 = vxor.u32 %v456, %v510
        %v524 = vxor.u32 %v457, %v510
        %v525 = vxor.u32 %v458, %v510
        %v526 = vxor.u32 %v459, %v510
        %v527 = vxor.u32 %v460, %v510
        %v528 = vxor.u32 %v461, %v510
        %v529 = vxor.u32 %v462, %v510
        %v530 = vxor.u32 %v463, %v510
        %v531 = vxor.u32 %v464, %v510
        %v532 = vxor.u32 %v465, %v510
        %v533 = vxor.u32 %v466, %v510
        %v534 = vxor.u32 %v467, %v510
        %v535 = vxor.u32 %v468, %v510
        %v536 = vxor.u32 %v469, %v510
        %v537 = vxor.u32 %v470, %v510
        %v538 = vxor.u32 %v471, %v510
        %v539 = vxor.u32 %v472, %v510
        %v540 = vxor.u32 %v473, %v510
        %v541 = vxor.u32 %v474, %v510
        %v542 = vxor.u32 %v475, %v510
        %v543 = vxor.u32 %v476, %v510
        %v544 = vxor.u32 %v477, %v510
        %v545 = vxor.u32 %v478, %v510
        %v546 = vxor.u32 %v479, %v510
        %v547 = vxor.u32 %v480, %v510
        %v548 = vxor.u32 %v481, %v510
        %v549 = vxor.u32 %v482, %v510
        %v550 = vxor.u32 %v483, %v510
        %v551 = vxor.u32 %v484, %v510
        %v552 = vxor.u32 %v485, %v510
        %v553 = vxor.u32 %v486, %v510
        %v554 = vxor.u32 %v487, %v510
        %v555 = vxor.u32 %v488, %v510
        %v556 = vxor.u32 %v489, %v510
        %v557 = vxor.u32 %v490, %v510
        %v558 = vxor.u32 %v491, %v510
        %v559 = vxor.u32 %v492, %v510
        %v560 = vxor.u32 %v493, %v510
        %v561 = vxor.u32 %v494, %v510
        %v562 = vxor.u32 %v495, %v510
        %v563 = vxor.u32 %v496, %v510
        %v564 = vxor.u32 %v497, %v510
        %v565 = vxor.u32 %v498, %v510
        %v566 = vxor.u32 %v499, %v510
        %v567 = vxor.u32 %v500, %v510
        %v568 = vxor.u32 %v501, %v510
        %v569 = vxor.u32 %v502, %v510
        %v570 = vxor.u32 %v503, %v510
        %v571 = vxor.u32 %v504, %v510
        %v572 = vxor.u32 %v505, %v510
        %v573 = vxor.u32 %v506, %v510
        %v574 = vxor.u32 %v507, %v510
        %v575 = vxor.u32 %v511, 2246822507
        %v576 = vxor.u32 %v512, 2246822507
        %v577 = vxor.u32 %v513, 2246822507
        %v578 = vxor.u32 %v514, 2246822507
        %v579 = vxor.u32 %v515, 2246822507
        %v580 = vxor.u32 %v516, 2246822507
        %v581 = vxor.u32 %v517, 2246822507
        %v582 = vxor.u32 %v518, 2246822507
        %v583 = vxor.u32 %v519, 2246822507
        %v584 = vxor.u32 %v520, 2246822507
        %v585 = vxor.u32 %v521, 2246822507
        %v586 = vxor.u32 %v522, 2246822507
        %v587 = vxor.u32 %v523, 2246822507
        %v588 = vxor.u32 %v524, 2246822507
        %v589 = vxor.u32 %v525, 2246822507
        %v590 = vxor.u32 %v526, 2246822507
        %v591 = vxor.u32 %v527, 2246822507
        %v592 = vxor.u32 %v528, 2246822507
        %v593 = vxor.u32 %v529, 2246822507
        %v594 = vxor.u32 %v530, 2246822507
        %v595 = vxor.u32 %v531, 2246822507
        %v596 = vxor.u32 %v532, 2246822507
        %v597 = vxor.u32 %v533, 2246822507
        %v598 = vxor.u32 %v534, 2246822507
        %v599 = vxor.u32 %v535, 2246822507
        %v600 = vxor.u32 %v536, 2246822507
        %v601 = vxor.u32 %v537, 2246822507
        %v602 = vxor.u32 %v538, 2246822507
        %v603 = vxor.u32 %v539, 2246822507
        %v604 = vxor.u32 %v540, 2246822507
        %v605 = vxor.u32 %v541, 2246822507
        %v606 = vxor.u32 %v542, 2246822507
        %v607 = vxor.u32 %v543, 2246822507
        %v608 = vxor.u32 %v544, 2246822507
        %v609 = vxor.u32 %v545, 2246822507
        %v610 = vxor.u32 %v546, 2246822507
        %v611 = vxor.u32 %v547, 2246822507
        %v612 = vxor.u32 %v548, 2246822507
        %v613 = vxor.u32 %v549, 2246822507
        %v614 = vxor.u32 %v550, 2246822507
        %v615 = vxor.u32 %v551, 2246822507
        %v616 = vxor.u32 %v552, 2246822507
        %v617 = vxor.u32 %v553, 2246822507
        %v618 = vxor.u32 %v554, 2246822507
        %v619 = vxor.u32 %v555, 2246822507
        %v620 = vxor.u32 %v556, 2246822507
        %v621 = vxor.u32 %v557, 2246822507
        %v622 = vxor.u32 %v558, 2246822507
        %v623 = vxor.u32 %v559, 2246822507
        %v624 = vxor.u32 %v560, 2246822507
        %v625 = vxor.u32 %v561, 2246822507
        %v626 = vxor.u32 %v562, 2246822507
        %v627 = vxor.u32 %v563, 2246822507
        %v628 = vxor.u32 %v564, 2246822507
        %v629 = vxor.u32 %v565, 2246822507
        %v630 = vxor.u32 %v566, 2246822507
        %v631 = vxor.u32 %v567, 2246822507
        %v632 = vxor.u32 %v568, 2246822507
        %v633 = vxor.u32 %v569, 2246822507
        %v634 = vxor.u32 %v570, 2246822507
        %v635 = vxor.u32 %v571, 2246822507
        %v636 = vxor.u32 %v572, 2246822507
        %v637 = vxor.u32 %v573, 2246822507
        %v638 = vxor.u32 %v574, 2246822507
        %v639 = vmul.u32 %v575, 2654435769
        %v640 = vmul.u32 %v576, 2654435769
        %v641 = vmul.u32 %v577, 2654435769
        %v642 = vmul.u32 %v578, 2654435769
        %v643 = vmul.u32 %v579, 2654435769
        %v644 = vmul.u32 %v580, 2654435769
        %v645 = vmul.u32 %v581, 2654435769
        %v646 = vmul.u32 %v582, 2654435769
        %v647 = vmul.u32 %v583, 2654435769
        %v648 = vmul.u32 %v584, 2654435769
        %v649 = vmul.u32 %v585, 2654435769
        %v650 = vmul.u32 %v586, 2654435769
        %v651 = vmul.u32 %v587, 2654435769
        %v652 = vmul.u32 %v588, 2654435769
        %v653 = vmul.u32 %v589, 2654435769
        %v654 = vmul.u32 %v590, 2654435769
        %v655 = vmul.u32 %v591, 2654435769
        %v656 = vmul.u32 %v592, 2654435769
        %v657 = vmul.u32 %v593, 2654435769
        %v658 = vmul.u32 %v594, 2654435769
        %v659 = vmul.u32 %v595, 2654435769
        %v660 = vmul.u32 %v596, 2654435769
        %v661 = vmul.u32 %v597, 2654435769
        %v662 = vmul.u32 %v598, 2654435769
        %v663 = vmul.u32 %v599, 2654435769
        %v664 = vmul.u32 %v600, 2654435769
        %v665 = vmul.u32 %v601, 2654435769
        %v666 = vmul.u32 %v602, 2654435769
        %v667 = vmul.u32 %v603, 2654435769
        %v668 = vmul.u32 %v604, 2654435769
        %v669 = vmul.u32 %v605, 2654435769
        %v670 = vmul.u32 %v606, 2654435769
        %v671 = vmul.u32 %v607, 2654435769
        %v672 = vmul.u32 %v608, 2654435769
        %v673 = vmul.u32 %v609, 2654435769
        %v674 = vmul.u32 %v610, 2654435769
        %v675 = vmul.u32 %v611, 2654435769
        %v676 = vmul.u32 %v612, 2654435769
        %v677 = vmul.u32 %v613, 2654435769
        %v678 = vmul.u32 %v614, 2654435769
        %v679 = vmul.u32 %v615, 2654435769
        %v680 = vmul.u32 %v616, 2654435769
        %v681 = vmul.u32 %v617, 2654435769
        %v682 = vmul.u32 %v618, 2654435769
        %v683 = vmul.u32 %v619, 2654435769
        %v684 = vmul.u32 %v620, 2654435769
        %v685 = vmul.u32 %v621, 2654435769
        %v686 = vmul.u32 %v622, 2654435769
        %v687 = vmul.u32 %v623, 2654435769
        %v688 = vmul.u32 %v624, 2654435769
        %v689 = vmul.u32 %v625, 2654435769
        %v690 = vmul.u32 %v626, 2654435769
        %v691 = vmul.u32 %v627, 2654435769
        %v692 = vmul.u32 %v628, 2654435769
        %v693 = vmul.u32 %v629, 2654435769
        %v694 = vmul.u32 %v630, 2654435769
        %v695 = vmul.u32 %v631, 2654435769
        %v696 = vmul.u32 %v632, 2654435769
        %v697 = vmul.u32 %v633, 2654435769
        %v698 = vmul.u32 %v634, 2654435769
        %v699 = vmul.u32 %v635, 2654435769
        %v700 = vmul.u32 %v636, 2654435769
        %v701 = vmul.u32 %v637, 2654435769
        %v702 = vmul.u32 %v638, 2654435769
        %v703 = vshrl.u32 %v639, 16
        %v704 = vshrl.u32 %v640, 16
        %v705 = vshrl.u32 %v641, 16
        %v706 = vshrl.u32 %v642, 16
        %v707 = vshrl.u32 %v643, 16
        %v708 = vshrl.u32 %v644, 16
        %v709 = vshrl.u32 %v645, 16
        %v710 = vshrl.u32 %v646, 16
        %v711 = vshrl.u32 %v647, 16
        %v712 = vshrl.u32 %v648, 16
        %v713 = vshrl.u32 %v649, 16
        %v714 = vshrl.u32 %v650, 16
        %v715 = vshrl.u32 %v651, 16
        %v716 = vshrl.u32 %v652, 16
        %v717 = vshrl.u32 %v653, 16
        %v718 = vshrl.u32 %v654, 16
        %v719 = vshrl.u32 %v655, 16
        %v720 = vshrl.u32 %v656, 16
        %v721 = vshrl.u32 %v657, 16
        %v722 = vshrl.u32 %v658, 16
        %v723 = vshrl.u32 %v659, 16
        %v724 = vshrl.u32 %v660, 16
        %v725 = vshrl.u32 %v661, 16
        %v726 = vshrl.u32 %v662, 16
        %v727 = vshrl.u32 %v663, 16
        %v728 = vshrl.u32 %v664, 16
        %v729 = vshrl.u32 %v665, 16
        %v730 = vshrl.u32 %v666, 16
        %v731 = vshrl.u32 %v667, 16
        %v732 = vshrl.u32 %v668, 16
        %v733 = vshrl.u32 %v669, 16
        %v734 = vshrl.u32 %v670, 16
        %v735 = vshrl.u32 %v671, 16
        %v736 = vshrl.u32 %v672, 16
        %v737 = vshrl.u32 %v673, 16
        %v738 = vshrl.u32 %v674, 16
        %v739 = vshrl.u32 %v675, 16
        %v740 = vshrl.u32 %v676, 16
        %v741 = vshrl.u32 %v677, 16
        %v742 = vshrl.u32 %v678, 16
        %v743 = vshrl.u32 %v679, 16
        %v744 = vshrl.u32 %v680, 16
        %v745 = vshrl.u32 %v681, 16
        %v746 = vshrl.u32 %v682, 16
        %v747 = vshrl.u32 %v683, 16
        %v748 = vshrl.u32 %v684, 16
        %v749 = vshrl.u32 %v685, 16
        %v750 = vshrl.u32 %v686, 16
        %v751 = vshrl.u32 %v687, 16
        %v752 = vshrl.u32 %v688, 16
        %v753 = vshrl.u32 %v689, 16
        %v754 = vshrl.u32 %v690, 16
        %v755 = vshrl.u32 %v691, 16
        %v756 = vshrl.u32 %v692, 16
        %v757 = vshrl.u32 %v693, 16
        %v758 = vshrl.u32 %v694, 16
        %v759 = vshrl.u32 %v695, 16
        %v760 = vshrl.u32 %v696, 16
        %v761 = vshrl.u32 %v697, 16
        %v762 = vshrl.u32 %v698, 16
        %v763 = vshrl.u32 %v699, 16
        %v764 = vshrl.u32 %v700, 16
        %v765 = vshrl.u32 %v701, 16
        %v766 = vshrl.u32 %v702, 16
        %v767 = vxor.u32 %v639, %v703
        %v768 = vxor.u32 %v640, %v704
        %v769 = vxor.u32 %v641, %v705
        %v770 = vxor.u32 %v642, %v706
        %v771 = vxor.u32 %v643, %v707
        %v772 = vxor.u32 %v644, %v708
        %v773 = vxor.u32 %v645, %v709
        %v774 = vxor.u32 %v646, %v710
        %v775 = vxor.u32 %v647, %v711
        %v776 = vxor.u32 %v648, %v712
        %v777 = vxor.u32 %v649, %v713
        %v778 = vxor.u32 %v650, %v714
        %v779 = vxor.u32 %v651, %v715
        %v780 = vxor.u32 %v652, %v716
        %v781 = vxor.u32 %v653, %v717
        %v782 = vxor.u32 %v654, %v718
        %v783 = vxor.u32 %v655, %v719
        %v784 = vxor.u32 %v656, %v720
        %v785 = vxor.u32 %v657, %v721
        %v786 = vxor.u32 %v658, %v722
        %v787 = vxor.u32 %v659, %v723
        %v788 = vxor.u32 %v660, %v724
        %v789 = vxor.u32 %v661, %v725
        %v790 = vxor.u32 %v662, %v726
        %v791 = vxor.u32 %v663, %v727
        %v792 = vxor.u32 %v664, %v728
        %v793 = vxor.u32 %v665, %v729
        %v794 = vxor.u32 %v666, %v730
        %v795 = vxor.u32 %v667, %v731
        %v796 = vxor.u32 %v668, %v732
        %v797 = vxor.u32 %v669, %v733
        %v798 = vxor.u32 %v670, %v734
        %v799 = vxor.u32 %v671, %v735
        %v800 = vxor.u32 %v672, %v736
        %v801 = vxor.u32 %v673, %v737
        %v802 = vxor.u32 %v674, %v738
        %v803 = vxor.u32 %v675, %v739
        %v804 = vxor.u32 %v676, %v740
        %v805 = vxor.u32 %v677, %v741
        %v806 = vxor.u32 %v678, %v742
        %v807 = vxor.u32 %v679, %v743
        %v808 = vxor.u32 %v680, %v744
        %v809 = vxor.u32 %v681, %v745
        %v810 = vxor.u32 %v682, %v746
        %v811 = vxor.u32 %v683, %v747
        %v812 = vxor.u32 %v684, %v748
        %v813 = vxor.u32 %v685, %v749
        %v814 = vxor.u32 %v686, %v750
        %v815 = vxor.u32 %v687, %v751
        %v816 = vxor.u32 %v688, %v752
        %v817 = vxor.u32 %v689, %v753
        %v818 = vxor.u32 %v690, %v754
        %v819 = vxor.u32 %v691, %v755
        %v820 = vxor.u32 %v692, %v756
        %v821 = vxor.u32 %v693, %v757
        %v822 = vxor.u32 %v694, %v758
        %v823 = vxor.u32 %v695, %v759
        %v824 = vxor.u32 %v696, %v760
        %v825 = vxor.u32 %v697, %v761
        %v826 = vxor.u32 %v698, %v762
        %v827 = vxor.u32 %v699, %v763
        %v828 = vxor.u32 %v700, %v764
        %v829 = vxor.u32 %v701, %v765
        %v830 = vxor.u32 %v702, %v766
        %v831 = vmul.u32 %v767, 2246822507
        %v832 = vmul.u32 %v768, 2246822507
        %v833 = vmul.u32 %v769, 2246822507
        %v834 = vmul.u32 %v770, 2246822507
        %v835 = vmul.u32 %v771, 2246822507
        %v836 = vmul.u32 %v772, 2246822507
        %v837 = vmul.u32 %v773, 2246822507
        %v838 = vmul.u32 %v774, 2246822507
        %v839 = vmul.u32 %v775, 2246822507
        %v840 = vmul.u32 %v776, 2246822507
        %v841 = vmul.u32 %v777, 2246822507
        %v842 = vmul.u32 %v778, 2246822507
        %v843 = vmul.u32 %v779, 2246822507
        %v844 = vmul.u32 %v780, 2246822507
        %v845 = vmul.u32 %v781, 2246822507
        %v846 = vmul.u32 %v782, 2246822507
        %v847 = vmul.u32 %v783, 2246822507
        %v848 = vmul.u32 %v784, 2246822507
        %v849 = vmul.u32 %v785, 2246822507
        %v850 = vmul.u32 %v786, 2246822507
        %v851 = vmul.u32 %v787, 2246822507
        %v852 = vmul.u32 %v788, 2246822507
        %v853 = vmul.u32 %v789, 2246822507
        %v854 = vmul.u32 %v790, 2246822507
        %v855 = vmul.u32 %v791, 2246822507
        %v856 = vmul.u32 %v792, 2246822507
        %v857 = vmul.u32 %v793, 2246822507
        %v858 = vmul.u32 %v794, 2246822507
        %v859 = vmul.u32 %v795, 2246822507
        %v860 = vmul.u32 %v796, 2246822507
        %v861 = vmul.u32 %v797, 2246822507
        %v862 = vmul.u32 %v798, 2246822507
        %v863 = vmul.u32 %v799, 2246822507
        %v864 = vmul.u32 %v800, 2246822507
        %v865 = vmul.u32 %v801, 2246822507
        %v866 = vmul.u32 %v802, 2246822507
        %v867 = vmul.u32 %v803, 2246822507
        %v868 = vmul.u32 %v804, 2246822507
        %v869 = vmul.u32 %v805, 2246822507
        %v870 = vmul.u32 %v806, 2246822507
        %v871 = vmul.u32 %v807, 2246822507
        %v872 = vmul.u32 %v808, 2246822507
        %v873 = vmul.u32 %v809, 2246822507
        %v874 = vmul.u32 %v810, 2246822507
        %v875 = vmul.u32 %v811, 2246822507
        %v876 = vmul.u32 %v812, 2246822507
        %v877 = vmul.u32 %v813, 2246822507
        %v878 = vmul.u32 %v814, 2246822507
        %v879 = vmul.u32 %v815, 2246822507
        %v880 = vmul.u32 %v816, 2246822507
        %v881 = vmul.u32 %v817, 2246822507
        %v882 = vmul.u32 %v818, 2246822507
        %v883 = vmul.u32 %v819, 2246822507
        %v884 = vmul.u32 %v820, 2246822507
        %v885 = vmul.u32 %v821, 2246822507
        %v886 = vmul.u32 %v822, 2246822507
        %v887 = vmul.u32 %v823, 2246822507
        %v888 = vmul.u32 %v824, 2246822507
        %v889 = vmul.u32 %v825, 2246822507
        %v890 = vmul.u32 %v826, 2246822507
        %v891 = vmul.u32 %v827, 2246822507
        %v892 = vmul.u32 %v828, 2246822507
        %v893 = vmul.u32 %v829, 2246822507
        %v894 = vmul.u32 %v830, 2246822507
        %v895 = vshrl.u32 %v831, 13
        %v896 = vshrl.u32 %v832, 13
        %v897 = vshrl.u32 %v833, 13
        %v898 = vshrl.u32 %v834, 13
        %v899 = vshrl.u32 %v835, 13
        %v900 = vshrl.u32 %v836, 13
        %v901 = vshrl.u32 %v837, 13
        %v902 = vshrl.u32 %v838, 13
        %v903 = vshrl.u32 %v839, 13
        %v904 = vshrl.u32 %v840, 13
        %v905 = vshrl.u32 %v841, 13
        %v906 = vshrl.u32 %v842, 13
        %v907 = vshrl.u32 %v843, 13
        %v908 = vshrl.u32 %v844, 13
        %v909 = vshrl.u32 %v845, 13
        %v910 = vshrl.u32 %v846, 13
        %v911 = vshrl.u32 %v847, 13
        %v912 = vshrl.u32 %v848, 13
        %v913 = vshrl.u32 %v849, 13
        %v914 = vshrl.u32 %v850, 13
        %v915 = vshrl.u32 %v851, 13
        %v916 = vshrl.u32 %v852, 13
        %v917 = vshrl.u32 %v853, 13
        %v918 = vshrl.u32 %v854, 13
        %v919 = vshrl.u32 %v855, 13
        %v920 = vshrl.u32 %v856, 13
        %v921 = vshrl.u32 %v857, 13
        %v922 = vshrl.u32 %v858, 13
        %v923 = vshrl.u32 %v859, 13
        %v924 = vshrl.u32 %v860, 13
        %v925 = vshrl.u32 %v861, 13
        %v926 = vshrl.u32 %v862, 13
        %v927 = vshrl.u32 %v863, 13
        %v928 = vshrl.u32 %v864, 13
        %v929 = vshrl.u32 %v865, 13
        %v930 = vshrl.u32 %v866, 13
        %v931 = vshrl.u32 %v867, 13
        %v932 = vshrl.u32 %v868, 13
        %v933 = vshrl.u32 %v869, 13
        %v934 = vshrl.u32 %v870, 13
        %v935 = vshrl.u32 %v871, 13
        %v936 = vshrl.u32 %v872, 13
        %v937 = vshrl.u32 %v873, 13
        %v938 = vshrl.u32 %v874, 13
        %v939 = vshrl.u32 %v875, 13
        %v940 = vshrl.u32 %v876, 13
        %v941 = vshrl.u32 %v877, 13
        %v942 = vshrl.u32 %v878, 13
        %v943 = vshrl.u32 %v879, 13
        %v944 = vshrl.u32 %v880, 13
        %v945 = vshrl.u32 %v881, 13
        %v946 = vshrl.u32 %v882, 13
        %v947 = vshrl.u32 %v883, 13
        %v948 = vshrl.u32 %v884, 13
        %v949 = vshrl.u32 %v885, 13
        %v950 = vshrl.u32 %v886, 13
        %v951 = vshrl.u32 %v887, 13
        %v952 = vshrl.u32 %v888, 13
        %v953 = vshrl.u32 %v889, 13
        %v954 = vshrl.u32 %v890, 13
        %v955 = vshrl.u32 %v891, 13
        %v956 = vshrl.u32 %v892, 13
        %v957 = vshrl.u32 %v893, 13
        %v958 = vshrl.u32 %v894, 13
        %v959 = vxor.u32 %v831, %v895
        %v960 = vxor.u32 %v832, %v896
        %v961 = vxor.u32 %v833, %v897
        %v962 = vxor.u32 %v834, %v898
        %v963 = vxor.u32 %v835, %v899
        %v964 = vxor.u32 %v836, %v900
        %v965 = vxor.u32 %v837, %v901
        %v966 = vxor.u32 %v838, %v902
        %v967 = vxor.u32 %v839, %v903
        %v968 = vxor.u32 %v840, %v904
        %v969 = vxor.u32 %v841, %v905
        %v970 = vxor.u32 %v842, %v906
        %v971 = vxor.u32 %v843, %v907
        %v972 = vxor.u32 %v844, %v908
        %v973 = vxor.u32 %v845, %v909
        %v974 = vxor.u32 %v846, %v910
        %v975 = vxor.u32 %v847, %v911
        %v976 = vxor.u32 %v848, %v912
        %v977 = vxor.u32 %v849, %v913
        %v978 = vxor.u32 %v850, %v914
        %v979 = vxor.u32 %v851, %v915
        %v980 = vxor.u32 %v852, %v916
        %v981 = vxor.u32 %v853, %v917
        %v982 = vxor.u32 %v854, %v918
        %v983 = vxor.u32 %v855, %v919
        %v984 = vxor.u32 %v856, %v920
        %v985 = vxor.u32 %v857, %v921
        %v986 = vxor.u32 %v858, %v922
        %v987 = vxor.u32 %v859, %v923
        %v988 = vxor.u32 %v860, %v924
        %v989 = vxor.u32 %v861, %v925
        %v990 = vxor.u32 %v862, %v926
        %v991 = vxor.u32 %v863, %v927
        %v992 = vxor.u32 %v864, %v928
        %v993 = vxor.u32 %v865, %v929
        %v994 = vxor.u32 %v866, %v930
        %v995 = vxor.u32 %v867, %v931
        %v996 = vxor.u32 %v868, %v932
        %v997 = vxor.u32 %v869, %v933
        %v998 = vxor.u32 %v870, %v934
        %v999 = vxor.u32 %v871, %v935
        %v1000 = vxor.u32 %v872, %v936
        %v1001 = vxor.u32 %v873, %v937
        %v1002 = vxor.u32 %v874, %v938
        %v1003 = vxor.u32 %v875, %v939
        %v1004 = vxor.u32 %v876, %v940
        %v1005 = vxor.u32 %v877, %v941
        %v1006 = vxor.u32 %v878, %v942
        %v1007 = vxor.u32 %v879, %v943
        %v1008 = vxor.u32 %v880, %v944
        %v1009 = vxor.u32 %v881, %v945
        %v1010 = vxor.u32 %v882, %v946
        %v1011 = vxor.u32 %v883, %v947
        %v1012 = vxor.u32 %v884, %v948
        %v1013 = vxor.u32 %v885, %v949
        %v1014 = vxor.u32 %v886, %v950
        %v1015 = vxor.u32 %v887, %v951
        %v1016 = vxor.u32 %v888, %v952
        %v1017 = vxor.u32 %v889, %v953
        %v1018 = vxor.u32 %v890, %v954
        %v1019 = vxor.u32 %v891, %v955
        %v1020 = vxor.u32 %v892, %v956
        %v1021 = vxor.u32 %v893, %v957
        %v1022 = vxor.u32 %v894, %v958
        %v1023 = vmul.u32 %v959, 3266489909
        %v1024 = vmul.u32 %v960, 3266489909
        %v1025 = vmul.u32 %v961, 3266489909
        %v1026 = vmul.u32 %v962, 3266489909
        %v1027 = vmul.u32 %v963, 3266489909
        %v1028 = vmul.u32 %v964, 3266489909
        %v1029 = vmul.u32 %v965, 3266489909
        %v1030 = vmul.u32 %v966, 3266489909
        %v1031 = vmul.u32 %v967, 3266489909
        %v1032 = vmul.u32 %v968, 3266489909
        %v1033 = vmul.u32 %v969, 3266489909
        %v1034 = vmul.u32 %v970, 3266489909
        %v1035 = vmul.u32 %v971, 3266489909
        %v1036 = vmul.u32 %v972, 3266489909
        %v1037 = vmul.u32 %v973, 3266489909
        %v1038 = vmul.u32 %v974, 3266489909
        %v1039 = vmul.u32 %v975, 3266489909
        %v1040 = vmul.u32 %v976, 3266489909
        %v1041 = vmul.u32 %v977, 3266489909
        %v1042 = vmul.u32 %v978, 3266489909
        %v1043 = vmul.u32 %v979, 3266489909
        %v1044 = vmul.u32 %v980, 3266489909
        %v1045 = vmul.u32 %v981, 3266489909
        %v1046 = vmul.u32 %v982, 3266489909
        %v1047 = vmul.u32 %v983, 3266489909
        %v1048 = vmul.u32 %v984, 3266489909
        %v1049 = vmul.u32 %v985, 3266489909
        %v1050 = vmul.u32 %v986, 3266489909
        %v1051 = vmul.u32 %v987, 3266489909
        %v1052 = vmul.u32 %v988, 3266489909
        %v1053 = vmul.u32 %v989, 3266489909
        %v1054 = vmul.u32 %v990, 3266489909
        %v1055 = vmul.u32 %v991, 3266489909
        %v1056 = vmul.u32 %v992, 3266489909
        %v1057 = vmul.u32 %v993, 3266489909
        %v1058 = vmul.u32 %v994, 3266489909
        %v1059 = vmul.u32 %v995, 3266489909
        %v1060 = vmul.u32 %v996, 3266489909
        %v1061 = vmul.u32 %v997, 3266489909
        %v1062 = vmul.u32 %v998, 3266489909
        %v1063 = vmul.u32 %v999, 3266489909
        %v1064 = vmul.u32 %v1000, 3266489909
        %v1065 = vmul.u32 %v1001, 3266489909
        %v1066 = vmul.u32 %v1002, 3266489909
        %v1067 = vmul.u32 %v1003, 3266489909
        %v1068 = vmul.u32 %v1004, 3266489909
        %v1069 = vmul.u32 %v1005, 3266489909
        %v1070 = vmul.u32 %v1006, 3266489909
        %v1071 = vmul.u32 %v1007, 3266489909
        %v1072 = vmul.u32 %v1008, 3266489909
        %v1073 = vmul.u32 %v1009, 3266489909
        %v1074 = vmul.u32 %v1010, 3266489909
        %v1075 = vmul.u32 %v1011, 3266489909
        %v1076 = vmul.u32 %v1012, 3266489909
        %v1077 = vmul.u32 %v1013, 3266489909
        %v1078 = vmul.u32 %v1014, 3266489909
        %v1079 = vmul.u32 %v1015, 3266489909
        %v1080 = vmul.u32 %v1016, 3266489909
        %v1081 = vmul.u32 %v1017, 3266489909
        %v1082 = vmul.u32 %v1018, 3266489909
        %v1083 = vmul.u32 %v1019, 3266489909
        %v1084 = vmul.u32 %v1020, 3266489909
        %v1085 = vmul.u32 %v1021, 3266489909
        %v1086 = vmul.u32 %v1022, 3266489909
        %v1087 = vshrl.u32 %v1023, 16
        %v1088 = vshrl.u32 %v1024, 16
        %v1089 = vshrl.u32 %v1025, 16
        %v1090 = vshrl.u32 %v1026, 16
        %v1091 = vshrl.u32 %v1027, 16
        %v1092 = vshrl.u32 %v1028, 16
        %v1093 = vshrl.u32 %v1029, 16
        %v1094 = vshrl.u32 %v1030, 16
        %v1095 = vshrl.u32 %v1031, 16
        %v1096 = vshrl.u32 %v1032, 16
        %v1097 = vshrl.u32 %v1033, 16
        %v1098 = vshrl.u32 %v1034, 16
        %v1099 = vshrl.u32 %v1035, 16
        %v1100 = vshrl.u32 %v1036, 16
        %v1101 = vshrl.u32 %v1037, 16
        %v1102 = vshrl.u32 %v1038, 16
        %v1103 = vshrl.u32 %v1039, 16
        %v1104 = vshrl.u32 %v1040, 16
        %v1105 = vshrl.u32 %v1041, 16
        %v1106 = vshrl.u32 %v1042, 16
        %v1107 = vshrl.u32 %v1043, 16
        %v1108 = vshrl.u32 %v1044, 16
        %v1109 = vshrl.u32 %v1045, 16
        %v1110 = vshrl.u32 %v1046, 16
        %v1111 = vshrl.u32 %v1047, 16
        %v1112 = vshrl.u32 %v1048, 16
        %v1113 = vshrl.u32 %v1049, 16
        %v1114 = vshrl.u32 %v1050, 16
        %v1115 = vshrl.u32 %v1051, 16
        %v1116 = vshrl.u32 %v1052, 16
        %v1117 = vshrl.u32 %v1053, 16
        %v1118 = vshrl.u32 %v1054, 16
        %v1119 = vshrl.u32 %v1055, 16
        %v1120 = vshrl.u32 %v1056, 16
        %v1121 = vshrl.u32 %v1057, 16
        %v1122 = vshrl.u32 %v1058, 16
        %v1123 = vshrl.u32 %v1059, 16
        %v1124 = vshrl.u32 %v1060, 16
        %v1125 = vshrl.u32 %v1061, 16
        %v1126 = vshrl.u32 %v1062, 16
        %v1127 = vshrl.u32 %v1063, 16
        %v1128 = vshrl.u32 %v1064, 16
        %v1129 = vshrl.u32 %v1065, 16
        %v1130 = vshrl.u32 %v1066, 16
        %v1131 = vshrl.u32 %v1067, 16
        %v1132 = vshrl.u32 %v1068, 16
        %v1133 = vshrl.u32 %v1069, 16
        %v1134 = vshrl.u32 %v1070, 16
        %v1135 = vshrl.u32 %v1071, 16
        %v1136 = vshrl.u32 %v1072, 16
        %v1137 = vshrl.u32 %v1073, 16
        %v1138 = vshrl.u32 %v1074, 16
        %v1139 = vshrl.u32 %v1075, 16
        %v1140 = vshrl.u32 %v1076, 16
        %v1141 = vshrl.u32 %v1077, 16
        %v1142 = vshrl.u32 %v1078, 16
        %v1143 = vshrl.u32 %v1079, 16
        %v1144 = vshrl.u32 %v1080, 16
        %v1145 = vshrl.u32 %v1081, 16
        %v1146 = vshrl.u32 %v1082, 16
        %v1147 = vshrl.u32 %v1083, 16
        %v1148 = vshrl.u32 %v1084, 16
        %v1149 = vshrl.u32 %v1085, 16
        %v1150 = vshrl.u32 %v1086, 16
        %v1151 = vxor.u32 %v1023, %v1087
        %v1152 = vxor.u32 %v1024, %v1088
        %v1153 = vxor.u32 %v1025, %v1089
        %v1154 = vxor.u32 %v1026, %v1090
        %v1155 = vxor.u32 %v1027, %v1091
        %v1156 = vxor.u32 %v1028, %v1092
        %v1157 = vxor.u32 %v1029, %v1093
        %v1158 = vxor.u32 %v1030, %v1094
        %v1159 = vxor.u32 %v1031, %v1095
        %v1160 = vxor.u32 %v1032, %v1096
        %v1161 = vxor.u32 %v1033, %v1097
        %v1162 = vxor.u32 %v1034, %v1098
        %v1163 = vxor.u32 %v1035, %v1099
        %v1164 = vxor.u32 %v1036, %v1100
        %v1165 = vxor.u32 %v1037, %v1101
        %v1166 = vxor.u32 %v1038, %v1102
        %v1167 = vxor.u32 %v1039, %v1103
        %v1168 = vxor.u32 %v1040, %v1104
        %v1169 = vxor.u32 %v1041, %v1105
        %v1170 = vxor.u32 %v1042, %v1106
        %v1171 = vxor.u32 %v1043, %v1107
        %v1172 = vxor.u32 %v1044, %v1108
        %v1173 = vxor.u32 %v1045, %v1109
        %v1174 = vxor.u32 %v1046, %v1110
        %v1175 = vxor.u32 %v1047, %v1111
        %v1176 = vxor.u32 %v1048, %v1112
        %v1177 = vxor.u32 %v1049, %v1113
        %v1178 = vxor.u32 %v1050, %v1114
        %v1179 = vxor.u32 %v1051, %v1115
        %v1180 = vxor.u32 %v1052, %v1116
        %v1181 = vxor.u32 %v1053, %v1117
        %v1182 = vxor.u32 %v1054, %v1118
        %v1183 = vxor.u32 %v1055, %v1119
        %v1184 = vxor.u32 %v1056, %v1120
        %v1185 = vxor.u32 %v1057, %v1121
        %v1186 = vxor.u32 %v1058, %v1122
        %v1187 = vxor.u32 %v1059, %v1123
        %v1188 = vxor.u32 %v1060, %v1124
        %v1189 = vxor.u32 %v1061, %v1125
        %v1190 = vxor.u32 %v1062, %v1126
        %v1191 = vxor.u32 %v1063, %v1127
        %v1192 = vxor.u32 %v1064, %v1128
        %v1193 = vxor.u32 %v1065, %v1129
        %v1194 = vxor.u32 %v1066, %v1130
        %v1195 = vxor.u32 %v1067, %v1131
        %v1196 = vxor.u32 %v1068, %v1132
        %v1197 = vxor.u32 %v1069, %v1133
        %v1198 = vxor.u32 %v1070, %v1134
        %v1199 = vxor.u32 %v1071, %v1135
        %v1200 = vxor.u32 %v1072, %v1136
        %v1201 = vxor.u32 %v1073, %v1137
        %v1202 = vxor.u32 %v1074, %v1138
        %v1203 = vxor.u32 %v1075, %v1139
        %v1204 = vxor.u32 %v1076, %v1140
        %v1205 = vxor.u32 %v1077, %v1141
        %v1206 = vxor.u32 %v1078, %v1142
        %v1207 = vxor.u32 %v1079, %v1143
        %v1208 = vxor.u32 %v1080, %v1144
        %v1209 = vxor.u32 %v1081, %v1145
        %v1210 = vxor.u32 %v1082, %v1146
        %v1211 = vxor.u32 %v1083, %v1147
        %v1212 = vxor.u32 %v1084, %v1148
        %v1213 = vxor.u32 %v1085, %v1149
        %v1214 = vxor.u32 %v1086, %v1150
        %vm1215 = vcmp.lt.u32.totalorder %v1151, 2147483648
        %vm1216 = vcmp.lt.u32.totalorder %v1152, 2147483648
        %vm1217 = vcmp.lt.u32.totalorder %v1153, 2147483648
        %vm1218 = vcmp.lt.u32.totalorder %v1154, 2147483648
        %vm1219 = vcmp.lt.u32.totalorder %v1155, 2147483648
        %vm1220 = vcmp.lt.u32.totalorder %v1156, 2147483648
        %vm1221 = vcmp.lt.u32.totalorder %v1157, 2147483648
        %vm1222 = vcmp.lt.u32.totalorder %v1158, 2147483648
        %vm1223 = vcmp.lt.u32.totalorder %v1159, 2147483648
        %vm1224 = vcmp.lt.u32.totalorder %v1160, 2147483648
        %vm1225 = vcmp.lt.u32.totalorder %v1161, 2147483648
        %vm1226 = vcmp.lt.u32.totalorder %v1162, 2147483648
        %vm1227 = vcmp.lt.u32.totalorder %v1163, 2147483648
        %vm1228 = vcmp.lt.u32.totalorder %v1164, 2147483648
        %vm1229 = vcmp.lt.u32.totalorder %v1165, 2147483648
        %vm1230 = vcmp.lt.u32.totalorder %v1166, 2147483648
        %vm1231 = vcmp.lt.u32.totalorder %v1167, 2147483648
        %vm1232 = vcmp.lt.u32.totalorder %v1168, 2147483648
        %vm1233 = vcmp.lt.u32.totalorder %v1169, 2147483648
        %vm1234 = vcmp.lt.u32.totalorder %v1170, 2147483648
        %vm1235 = vcmp.lt.u32.totalorder %v1171, 2147483648
        %vm1236 = vcmp.lt.u32.totalorder %v1172, 2147483648
        %vm1237 = vcmp.lt.u32.totalorder %v1173, 2147483648
        %vm1238 = vcmp.lt.u32.totalorder %v1174, 2147483648
        %vm1239 = vcmp.lt.u32.totalorder %v1175, 2147483648
        %vm1240 = vcmp.lt.u32.totalorder %v1176, 2147483648
        %vm1241 = vcmp.lt.u32.totalorder %v1177, 2147483648
        %vm1242 = vcmp.lt.u32.totalorder %v1178, 2147483648
        %vm1243 = vcmp.lt.u32.totalorder %v1179, 2147483648
        %vm1244 = vcmp.lt.u32.totalorder %v1180, 2147483648
        %vm1245 = vcmp.lt.u32.totalorder %v1181, 2147483648
        %vm1246 = vcmp.lt.u32.totalorder %v1182, 2147483648
        %vm1247 = vcmp.lt.u32.totalorder %v1183, 2147483648
        %vm1248 = vcmp.lt.u32.totalorder %v1184, 2147483648
        %vm1249 = vcmp.lt.u32.totalorder %v1185, 2147483648
        %vm1250 = vcmp.lt.u32.totalorder %v1186, 2147483648
        %vm1251 = vcmp.lt.u32.totalorder %v1187, 2147483648
        %vm1252 = vcmp.lt.u32.totalorder %v1188, 2147483648
        %vm1253 = vcmp.lt.u32.totalorder %v1189, 2147483648
        %vm1254 = vcmp.lt.u32.totalorder %v1190, 2147483648
        %vm1255 = vcmp.lt.u32.totalorder %v1191, 2147483648
        %vm1256 = vcmp.lt.u32.totalorder %v1192, 2147483648
        %vm1257 = vcmp.lt.u32.totalorder %v1193, 2147483648
        %vm1258 = vcmp.lt.u32.totalorder %v1194, 2147483648
        %vm1259 = vcmp.lt.u32.totalorder %v1195, 2147483648
        %vm1260 = vcmp.lt.u32.totalorder %v1196, 2147483648
        %vm1261 = vcmp.lt.u32.totalorder %v1197, 2147483648
        %vm1262 = vcmp.lt.u32.totalorder %v1198, 2147483648
        %vm1263 = vcmp.lt.u32.totalorder %v1199, 2147483648
        %vm1264 = vcmp.lt.u32.totalorder %v1200, 2147483648
        %vm1265 = vcmp.lt.u32.totalorder %v1201, 2147483648
        %vm1266 = vcmp.lt.u32.totalorder %v1202, 2147483648
        %vm1267 = vcmp.lt.u32.totalorder %v1203, 2147483648
        %vm1268 = vcmp.lt.u32.totalorder %v1204, 2147483648
        %vm1269 = vcmp.lt.u32.totalorder %v1205, 2147483648
        %vm1270 = vcmp.lt.u32.totalorder %v1206, 2147483648
        %vm1271 = vcmp.lt.u32.totalorder %v1207, 2147483648
        %vm1272 = vcmp.lt.u32.totalorder %v1208, 2147483648
        %vm1273 = vcmp.lt.u32.totalorder %v1209, 2147483648
        %vm1274 = vcmp.lt.u32.totalorder %v1210, 2147483648
        %vm1275 = vcmp.lt.u32.totalorder %v1211, 2147483648
        %vm1276 = vcmp.lt.u32.totalorder %v1212, 2147483648
        %vm1277 = vcmp.lt.u32.totalorder %v1213, 2147483648
        %vm1278 = vcmp.lt.u32.totalorder %v1214, 2147483648
        %v1279 = vsel %vm1215, 1, 0
        %v1280 = vsel %vm1216, 1, 0
        %v1281 = vsel %vm1217, 1, 0
        %v1282 = vsel %vm1218, 1, 0
        %v1283 = vsel %vm1219, 1, 0
        %v1284 = vsel %vm1220, 1, 0
        %v1285 = vsel %vm1221, 1, 0
        %v1286 = vsel %vm1222, 1, 0
        %v1287 = vsel %vm1223, 1, 0
        %v1288 = vsel %vm1224, 1, 0
        %v1289 = vsel %vm1225, 1, 0
        %v1290 = vsel %vm1226, 1, 0
        %v1291 = vsel %vm1227, 1, 0
        %v1292 = vsel %vm1228, 1, 0
        %v1293 = vsel %vm1229, 1, 0
        %v1294 = vsel %vm1230, 1, 0
        %v1295 = vsel %vm1231, 1, 0
        %v1296 = vsel %vm1232, 1, 0
        %v1297 = vsel %vm1233, 1, 0
        %v1298 = vsel %vm1234, 1, 0
        %v1299 = vsel %vm1235, 1, 0
        %v1300 = vsel %vm1236, 1, 0
        %v1301 = vsel %vm1237, 1, 0
        %v1302 = vsel %vm1238, 1, 0
        %v1303 = vsel %vm1239, 1, 0
        %v1304 = vsel %vm1240, 1, 0
        %v1305 = vsel %vm1241, 1, 0
        %v1306 = vsel %vm1242, 1, 0
        %v1307 = vsel %vm1243, 1, 0
        %v1308 = vsel %vm1244, 1, 0
        %v1309 = vsel %vm1245, 1, 0
        %v1310 = vsel %vm1246, 1, 0
        %v1311 = vsel %vm1247, 1, 0
        %v1312 = vsel %vm1248, 1, 0
        %v1313 = vsel %vm1249, 1, 0
        %v1314 = vsel %vm1250, 1, 0
        %v1315 = vsel %vm1251, 1, 0
        %v1316 = vsel %vm1252, 1, 0
        %v1317 = vsel %vm1253, 1, 0
        %v1318 = vsel %vm1254, 1, 0
        %v1319 = vsel %vm1255, 1, 0
        %v1320 = vsel %vm1256, 1, 0
        %v1321 = vsel %vm1257, 1, 0
        %v1322 = vsel %vm1258, 1, 0
        %v1323 = vsel %vm1259, 1, 0
        %v1324 = vsel %vm1260, 1, 0
        %v1325 = vsel %vm1261, 1, 0
        %v1326 = vsel %vm1262, 1, 0
        %v1327 = vsel %vm1263, 1, 0
        %v1328 = vsel %vm1264, 1, 0
        %v1329 = vsel %vm1265, 1, 0
        %v1330 = vsel %vm1266, 1, 0
        %v1331 = vsel %vm1267, 1, 0
        %v1332 = vsel %vm1268, 1, 0
        %v1333 = vsel %vm1269, 1, 0
        %v1334 = vsel %vm1270, 1, 0
        %v1335 = vsel %vm1271, 1, 0
        %v1336 = vsel %vm1272, 1, 0
        %v1337 = vsel %vm1273, 1, 0
        %v1338 = vsel %vm1274, 1, 0
        %v1339 = vsel %vm1275, 1, 0
        %v1340 = vsel %vm1276, 1, 0
        %v1341 = vsel %vm1277, 1, 0
        %v1342 = vsel %vm1278, 1, 0
        %v1343 = vcvt.s32.f32 %v1279
        %v1344 = vcvt.s32.f32 %v1280
        %v1345 = vcvt.s32.f32 %v1281
        %v1346 = vcvt.s32.f32 %v1282
        %v1347 = vcvt.s32.f32 %v1283
        %v1348 = vcvt.s32.f32 %v1284
        %v1349 = vcvt.s32.f32 %v1285
        %v1350 = vcvt.s32.f32 %v1286
        %v1351 = vcvt.s32.f32 %v1287
        %v1352 = vcvt.s32.f32 %v1288
        %v1353 = vcvt.s32.f32 %v1289
        %v1354 = vcvt.s32.f32 %v1290
        %v1355 = vcvt.s32.f32 %v1291
        %v1356 = vcvt.s32.f32 %v1292
        %v1357 = vcvt.s32.f32 %v1293
        %v1358 = vcvt.s32.f32 %v1294
        %v1359 = vcvt.s32.f32 %v1295
        %v1360 = vcvt.s32.f32 %v1296
        %v1361 = vcvt.s32.f32 %v1297
        %v1362 = vcvt.s32.f32 %v1298
        %v1363 = vcvt.s32.f32 %v1299
        %v1364 = vcvt.s32.f32 %v1300
        %v1365 = vcvt.s32.f32 %v1301
        %v1366 = vcvt.s32.f32 %v1302
        %v1367 = vcvt.s32.f32 %v1303
        %v1368 = vcvt.s32.f32 %v1304
        %v1369 = vcvt.s32.f32 %v1305
        %v1370 = vcvt.s32.f32 %v1306
        %v1371 = vcvt.s32.f32 %v1307
        %v1372 = vcvt.s32.f32 %v1308
        %v1373 = vcvt.s32.f32 %v1309
        %v1374 = vcvt.s32.f32 %v1310
        %v1375 = vcvt.s32.f32 %v1311
        %v1376 = vcvt.s32.f32 %v1312
        %v1377 = vcvt.s32.f32 %v1313
        %v1378 = vcvt.s32.f32 %v1314
        %v1379 = vcvt.s32.f32 %v1315
        %v1380 = vcvt.s32.f32 %v1316
        %v1381 = vcvt.s32.f32 %v1317
        %v1382 = vcvt.s32.f32 %v1318
        %v1383 = vcvt.s32.f32 %v1319
        %v1384 = vcvt.s32.f32 %v1320
        %v1385 = vcvt.s32.f32 %v1321
        %v1386 = vcvt.s32.f32 %v1322
        %v1387 = vcvt.s32.f32 %v1323
        %v1388 = vcvt.s32.f32 %v1324
        %v1389 = vcvt.s32.f32 %v1325
        %v1390 = vcvt.s32.f32 %v1326
        %v1391 = vcvt.s32.f32 %v1327
        %v1392 = vcvt.s32.f32 %v1328
        %v1393 = vcvt.s32.f32 %v1329
        %v1394 = vcvt.s32.f32 %v1330
        %v1395 = vcvt.s32.f32 %v1331
        %v1396 = vcvt.s32.f32 %v1332
        %v1397 = vcvt.s32.f32 %v1333
        %v1398 = vcvt.s32.f32 %v1334
        %v1399 = vcvt.s32.f32 %v1335
        %v1400 = vcvt.s32.f32 %v1336
        %v1401 = vcvt.s32.f32 %v1337
        %v1402 = vcvt.s32.f32 %v1338
        %v1403 = vcvt.s32.f32 %v1339
        %v1404 = vcvt.s32.f32 %v1340
        %v1405 = vcvt.s32.f32 %v1341
        %v1406 = vcvt.s32.f32 %v1342
        %v1407 = vmul.f32 %v1343, 2.0
        %v1408 = vmul.f32 %v1344, 2.0
        %v1409 = vmul.f32 %v1345, 2.0
        %v1410 = vmul.f32 %v1346, 2.0
        %v1411 = vmul.f32 %v1347, 2.0
        %v1412 = vmul.f32 %v1348, 2.0
        %v1413 = vmul.f32 %v1349, 2.0
        %v1414 = vmul.f32 %v1350, 2.0
        %v1415 = vmul.f32 %v1351, 2.0
        %v1416 = vmul.f32 %v1352, 2.0
        %v1417 = vmul.f32 %v1353, 2.0
        %v1418 = vmul.f32 %v1354, 2.0
        %v1419 = vmul.f32 %v1355, 2.0
        %v1420 = vmul.f32 %v1356, 2.0
        %v1421 = vmul.f32 %v1357, 2.0
        %v1422 = vmul.f32 %v1358, 2.0
        %v1423 = vmul.f32 %v1359, 2.0
        %v1424 = vmul.f32 %v1360, 2.0
        %v1425 = vmul.f32 %v1361, 2.0
        %v1426 = vmul.f32 %v1362, 2.0
        %v1427 = vmul.f32 %v1363, 2.0
        %v1428 = vmul.f32 %v1364, 2.0
        %v1429 = vmul.f32 %v1365, 2.0
        %v1430 = vmul.f32 %v1366, 2.0
        %v1431 = vmul.f32 %v1367, 2.0
        %v1432 = vmul.f32 %v1368, 2.0
        %v1433 = vmul.f32 %v1369, 2.0
        %v1434 = vmul.f32 %v1370, 2.0
        %v1435 = vmul.f32 %v1371, 2.0
        %v1436 = vmul.f32 %v1372, 2.0
        %v1437 = vmul.f32 %v1373, 2.0
        %v1438 = vmul.f32 %v1374, 2.0
        %v1439 = vmul.f32 %v1375, 2.0
        %v1440 = vmul.f32 %v1376, 2.0
        %v1441 = vmul.f32 %v1377, 2.0
        %v1442 = vmul.f32 %v1378, 2.0
        %v1443 = vmul.f32 %v1379, 2.0
        %v1444 = vmul.f32 %v1380, 2.0
        %v1445 = vmul.f32 %v1381, 2.0
        %v1446 = vmul.f32 %v1382, 2.0
        %v1447 = vmul.f32 %v1383, 2.0
        %v1448 = vmul.f32 %v1384, 2.0
        %v1449 = vmul.f32 %v1385, 2.0
        %v1450 = vmul.f32 %v1386, 2.0
        %v1451 = vmul.f32 %v1387, 2.0
        %v1452 = vmul.f32 %v1388, 2.0
        %v1453 = vmul.f32 %v1389, 2.0
        %v1454 = vmul.f32 %v1390, 2.0
        %v1455 = vmul.f32 %v1391, 2.0
        %v1456 = vmul.f32 %v1392, 2.0
        %v1457 = vmul.f32 %v1393, 2.0
        %v1458 = vmul.f32 %v1394, 2.0
        %v1459 = vmul.f32 %v1395, 2.0
        %v1460 = vmul.f32 %v1396, 2.0
        %v1461 = vmul.f32 %v1397, 2.0
        %v1462 = vmul.f32 %v1398, 2.0
        %v1463 = vmul.f32 %v1399, 2.0
        %v1464 = vmul.f32 %v1400, 2.0
        %v1465 = vmul.f32 %v1401, 2.0
        %v1466 = vmul.f32 %v1402, 2.0
        %v1467 = vmul.f32 %v1403, 2.0
        %v1468 = vmul.f32 %v1404, 2.0
        %v1469 = vmul.f32 %v1405, 2.0
        %v1470 = vmul.f32 %v1406, 2.0
        %v1471 = vmul.f32 %v278, %v1407
        %v1472 = vmul.f32 %v279, %v1408
        %v1473 = vmul.f32 %v280, %v1409
        %v1474 = vmul.f32 %v281, %v1410
        %v1475 = vmul.f32 %v282, %v1411
        %v1476 = vmul.f32 %v283, %v1412
        %v1477 = vmul.f32 %v284, %v1413
        %v1478 = vmul.f32 %v285, %v1414
        %v1479 = vmul.f32 %v286, %v1415
        %v1480 = vmul.f32 %v287, %v1416
        %v1481 = vmul.f32 %v288, %v1417
        %v1482 = vmul.f32 %v289, %v1418
        %v1483 = vmul.f32 %v290, %v1419
        %v1484 = vmul.f32 %v291, %v1420
        %v1485 = vmul.f32 %v292, %v1421
        %v1486 = vmul.f32 %v293, %v1422
        %v1487 = vmul.f32 %v294, %v1423
        %v1488 = vmul.f32 %v295, %v1424
        %v1489 = vmul.f32 %v296, %v1425
        %v1490 = vmul.f32 %v297, %v1426
        %v1491 = vmul.f32 %v298, %v1427
        %v1492 = vmul.f32 %v299, %v1428
        %v1493 = vmul.f32 %v300, %v1429
        %v1494 = vmul.f32 %v301, %v1430
        %v1495 = vmul.f32 %v302, %v1431
        %v1496 = vmul.f32 %v303, %v1432
        %v1497 = vmul.f32 %v304, %v1433
        %v1498 = vmul.f32 %v305, %v1434
        %v1499 = vmul.f32 %v306, %v1435
        %v1500 = vmul.f32 %v307, %v1436
        %v1501 = vmul.f32 %v308, %v1437
        %v1502 = vmul.f32 %v309, %v1438
        %v1503 = vmul.f32 %v310, %v1439
        %v1504 = vmul.f32 %v311, %v1440
        %v1505 = vmul.f32 %v312, %v1441
        %v1506 = vmul.f32 %v313, %v1442
        %v1507 = vmul.f32 %v314, %v1443
        %v1508 = vmul.f32 %v315, %v1444
        %v1509 = vmul.f32 %v316, %v1445
        %v1510 = vmul.f32 %v317, %v1446
        %v1511 = vmul.f32 %v318, %v1447
        %v1512 = vmul.f32 %v319, %v1448
        %v1513 = vmul.f32 %v320, %v1449
        %v1514 = vmul.f32 %v321, %v1450
        %v1515 = vmul.f32 %v322, %v1451
        %v1516 = vmul.f32 %v323, %v1452
        %v1517 = vmul.f32 %v324, %v1453
        %v1518 = vmul.f32 %v325, %v1454
        %v1519 = vmul.f32 %v326, %v1455
        %v1520 = vmul.f32 %v327, %v1456
        %v1521 = vmul.f32 %v328, %v1457
        %v1522 = vmul.f32 %v329, %v1458
        %v1523 = vmul.f32 %v330, %v1459
        %v1524 = vmul.f32 %v331, %v1460
        %v1525 = vmul.f32 %v332, %v1461
        %v1526 = vmul.f32 %v333, %v1462
        %v1527 = vmul.f32 %v334, %v1463
        %v1528 = vmul.f32 %v335, %v1464
        %v1529 = vmul.f32 %v336, %v1465
        %v1530 = vmul.f32 %v337, %v1466
        %v1531 = vmul.f32 %v338, %v1467
        %v1532 = vmul.f32 %v339, %v1468
        %v1533 = vmul.f32 %v340, %v1469
        %v1534 = vmul.f32 %v341, %v1470
        %v1535 = vpack.c.bf16 %v1473, %v1471
        %v1536 = vpack.c.bf16 %v1474, %v1472
        %v1537 = vpack.c.bf16 %v1477, %v1475
        %v1538 = vpack.c.bf16 %v1478, %v1476
        %v1539 = vpack.c.bf16 %v1481, %v1479
        %v1540 = vpack.c.bf16 %v1482, %v1480
        %v1541 = vpack.c.bf16 %v1485, %v1483
        %v1542 = vpack.c.bf16 %v1486, %v1484
        %v1543 = vpack.c.bf16 %v1489, %v1487
        %v1544 = vpack.c.bf16 %v1490, %v1488
        %v1545 = vpack.c.bf16 %v1493, %v1491
        %v1546 = vpack.c.bf16 %v1494, %v1492
        %v1547 = vpack.c.bf16 %v1497, %v1495
        %v1548 = vpack.c.bf16 %v1498, %v1496
        %v1549 = vpack.c.bf16 %v1501, %v1499
        %v1550 = vpack.c.bf16 %v1502, %v1500
        %v1551 = vpack.c.bf16 %v1505, %v1503
        %v1552 = vpack.c.bf16 %v1506, %v1504
        %v1553 = vpack.c.bf16 %v1509, %v1507
        %v1554 = vpack.c.bf16 %v1510, %v1508
        %v1555 = vpack.c.bf16 %v1513, %v1511
        %v1556 = vpack.c.bf16 %v1514, %v1512
        %v1557 = vpack.c.bf16 %v1517, %v1515
        %v1558 = vpack.c.bf16 %v1518, %v1516
        %v1559 = vpack.c.bf16 %v1521, %v1519
        %v1560 = vpack.c.bf16 %v1522, %v1520
        %v1561 = vpack.c.bf16 %v1525, %v1523
        %v1562 = vpack.c.bf16 %v1526, %v1524
        %v1563 = vpack.c.bf16 %v1529, %v1527
        %v1564 = vpack.c.bf16 %v1530, %v1528
        %v1565 = vpack.c.bf16 %v1533, %v1531
        %v1566 = vpack.c.bf16 %v1534, %v1532
        %v1567 = vld [vmem:[#allocation7] sm:$0xff]
        %v1568 = vld [vmem:[#allocation7 + $0x8] sm:$0xff]
        %v1569 = vld [vmem:[#allocation7 + $0x10] sm:$0xff]
        %v1570 = vld [vmem:[#allocation7 + $0x18] sm:$0xff]
        %v1571 = vld [vmem:[#allocation7 + $0x20] sm:$0xff]
        %v1572 = vld [vmem:[#allocation7 + $0x28] sm:$0xff]
        %v1573 = vld [vmem:[#allocation7 + $0x30] sm:$0xff]
        %v1574 = vld [vmem:[#allocation7 + $0x38] sm:$0xff]
        %v1575 = vld [vmem:[#allocation7 + $0x40] sm:$0xff]
        %v1576 = vld [vmem:[#allocation7 + $0x48] sm:$0xff]
        %v1577 = vld [vmem:[#allocation7 + $0x50] sm:$0xff]
        %v1578 = vld [vmem:[#allocation7 + $0x58] sm:$0xff]
        %v1579 = vld [vmem:[#allocation7 + $0x60] sm:$0xff]
        %v1580 = vld [vmem:[#allocation7 + $0x68] sm:$0xff]
        %v1581 = vld [vmem:[#allocation7 + $0x70] sm:$0xff]
        %v1582 = vld [vmem:[#allocation7 + $0x78] sm:$0xff]
        %v1583 = vld [vmem:[#allocation7 + $0x80] sm:$0xff]
        %v1584 = vld [vmem:[#allocation7 + $0x88] sm:$0xff]
        %v1585 = vld [vmem:[#allocation7 + $0x90] sm:$0xff]
        %v1586 = vld [vmem:[#allocation7 + $0x98] sm:$0xff]
        %v1587 = vld [vmem:[#allocation7 + $0xa0] sm:$0xff]
        %v1588 = vld [vmem:[#allocation7 + $0xa8] sm:$0xff]
        %v1589 = vld [vmem:[#allocation7 + $0xb0] sm:$0xff]
        %v1590 = vld [vmem:[#allocation7 + $0xb8] sm:$0xff]
        %v1591 = vld [vmem:[#allocation7 + $0xc0] sm:$0xff]
        %v1592 = vld [vmem:[#allocation7 + $0xc8] sm:$0xff]
        %v1593 = vld [vmem:[#allocation7 + $0xd0] sm:$0xff]
        %v1594 = vld [vmem:[#allocation7 + $0xd8] sm:$0xff]
        %v1595 = vld [vmem:[#allocation7 + $0xe0] sm:$0xff]
        %v1596 = vld [vmem:[#allocation7 + $0xe8] sm:$0xff]
        %v1597 = vld [vmem:[#allocation7 + $0xf0] sm:$0xff]
        %v1598 = vld [vmem:[#allocation7 + $0xf8] sm:$0xff]
        %v1599 = vpack.c.bf16 %v1568, %v1567
        %v1600 = vpack.c.bf16 %v1570, %v1569
        %v1601 = vpack.c.bf16 %v1572, %v1571
        %v1602 = vpack.c.bf16 %v1574, %v1573
        %v1603 = vpack.c.bf16 %v1576, %v1575
        %v1604 = vpack.c.bf16 %v1578, %v1577
        %v1605 = vpack.c.bf16 %v1580, %v1579
        %v1606 = vpack.c.bf16 %v1582, %v1581
        %v1607 = vpack.c.bf16 %v1584, %v1583
        %v1608 = vpack.c.bf16 %v1586, %v1585
        %v1609 = vpack.c.bf16 %v1588, %v1587
        %v1610 = vpack.c.bf16 %v1590, %v1589
        %v1611 = vpack.c.bf16 %v1592, %v1591
        %v1612 = vpack.c.bf16 %v1594, %v1593
        %v1613 = vpack.c.bf16 %v1596, %v1595
        %v1614 = vpack.c.bf16 %v1598, %v1597
        %v1615 = vld [vmem:[%s3] sm:$0x1]
        %v1617 = vlaneseq
        %v1618 = vshrl.u32 %v1617, 7
        %v1619 = vsub.s32 0, %v1618
        %v1620 = vrot.slane %v1615, %v1619
        %1622 = vmatprep.subr.bf16.mxu0 0
        %1623 = vmatpush1.bf16.msra.mxu0 %v1599
        %1624 = vmatprep.subr.bf16.mxu0 0
        %1625 = vmatpush1.bf16.msra.mxu0 %v1600
        %1626 = vmatprep.subr.bf16.mxu0 0
        %1627 = vmatpush1.bf16.msra.mxu0 %v1601
        %1628 = vmatprep.subr.bf16.mxu0 0
        %1629 = vmatpush1.bf16.msra.mxu0 %v1602
        %1630 = vmatprep.subr.bf16.mxu0 0
        %1631 = vmatpush1.bf16.msra.mxu0 %v1603
        %1632 = vmatprep.subr.bf16.mxu0 0
        %1633 = vmatpush1.bf16.msra.mxu0 %v1604
        %1634 = vmatprep.subr.bf16.mxu0 0
        %1635 = vmatpush1.bf16.msra.mxu0 %v1605
        %1636 = vmatprep.subr.bf16.mxu0 0
        %1637 = vmatpush1.bf16.msra.mxu0 %v1606
        %1638 = vmatprep.subr.bf16.mxu0 0
        %1639 = vmatpush1.bf16.msra.mxu0 %v1607
        %1640 = vmatprep.subr.bf16.mxu0 0
        %1641 = vmatpush1.bf16.msra.mxu0 %v1608
        %1642 = vmatprep.subr.bf16.mxu0 0
        %1643 = vmatpush1.bf16.msra.mxu0 %v1609
        %1644 = vmatprep.subr.bf16.mxu0 0
        %1645 = vmatpush1.bf16.msra.mxu0 %v1610
        %1646 = vmatprep.subr.bf16.mxu0 0
        %1647 = vmatpush1.bf16.msra.mxu0 %v1611
        %1648 = vmatprep.subr.bf16.mxu0 0
        %1649 = vmatpush1.bf16.msra.mxu0 %v1612
        %1650 = vmatprep.subr.bf16.mxu0 0
        %1651 = vmatpush1.bf16.msra.mxu0 %v1613
        %1652 = vmatprep.subr.bf16.mxu0 0
        %1653 = vmatpush1.bf16.msra.mxu0 %v1614
        %1654 = vmatprep.mubr.bf16.mxu0 %v1536
        %1655 = vmatmul.mubr.bf16.gmra.mrb[0].mxu0 %v1535
        %v1656 = vpop.f32.mrb[0].mxu0
        %v1657 = vadd.f32 %v1620, %v1656
        %v1658 = vpop.f32.mrb[0].mxu0
        %v1659 = vpop.f32.mrb[0].mxu0
        %v1660 = vadd.f32 %v1620, %v1659
        %v1661 = vpop.f32.mrb[0].mxu0
        %1662 = vmatprep.mubr.bf16.mxu0 %v1538
        %1663 = vmatmul.mubr.bf16.gmra.mrb[0].mxu0 %v1537
        %v1664 = vpop.f32.mrb[0].mxu0
        %v1665 = vadd.f32 %v1620, %v1664
        %v1666 = vpop.f32.mrb[0].mxu0
        %v1667 = vpop.f32.mrb[0].mxu0
        %v1668 = vadd.f32 %v1620, %v1667
        %v1669 = vpop.f32.mrb[0].mxu0
        %1670 = vmatprep.mubr.bf16.mxu0 %v1540
        %1671 = vmatmul.mubr.bf16.gmra.mrb[0].mxu0 %v1539
        %v1672 = vpop.f32.mrb[0].mxu0
        %v1673 = vadd.f32 %v1620, %v1672
        %v1674 = vpop.f32.mrb[0].mxu0
        %v1675 = vpop.f32.mrb[0].mxu0
        %v1676 = vadd.f32 %v1620, %v1675
        %v1677 = vpop.f32.mrb[0].mxu0
        %1678 = vmatprep.mubr.bf16.mxu0 %v1542
        %1679 = vmatmul.mubr.bf16.gmra.mrb[0].mxu0 %v1541
        %v1680 = vpop.f32.mrb[0].mxu0
        %v1681 = vadd.f32 %v1620, %v1680
        %v1682 = vpop.f32.mrb[0].mxu0
        %v1683 = vpop.f32.mrb[0].mxu0
        %v1684 = vadd.f32 %v1620, %v1683
        %v1685 = vpop.f32.mrb[0].mxu0
        %1686 = vmatprep.mubr.bf16.mxu0 %v1544
        %1687 = vmatmul.mubr.bf16.gmra.mrb[0].mxu0 %v1543
        %v1688 = vpop.f32.mrb[0].mxu0
        %v1689 = vadd.f32 %v1620, %v1688
        %v1690 = vpop.f32.mrb[0].mxu0
        %v1691 = vpop.f32.mrb[0].mxu0
        %v1692 = vadd.f32 %v1620, %v1691
        %v1693 = vpop.f32.mrb[0].mxu0
        %1694 = vmatprep.mubr.bf16.mxu0 %v1546
        %1695 = vmatmul.mubr.bf16.gmra.mrb[0].mxu0 %v1545
        %v1696 = vpop.f32.mrb[0].mxu0
        %v1697 = vadd.f32 %v1620, %v1696
        %v1698 = vpop.f32.mrb[0].mxu0
        %v1699 = vpop.f32.mrb[0].mxu0
        %v1700 = vadd.f32 %v1620, %v1699
        %v1701 = vpop.f32.mrb[0].mxu0
        %1702 = vmatprep.mubr.bf16.mxu0 %v1548
        %1703 = vmatmul.mubr.bf16.gmra.mrb[0].mxu0 %v1547
        %v1704 = vpop.f32.mrb[0].mxu0
        %v1705 = vadd.f32 %v1620, %v1704
        %v1706 = vpop.f32.mrb[0].mxu0
        %v1707 = vpop.f32.mrb[0].mxu0
        %v1708 = vadd.f32 %v1620, %v1707
        %v1709 = vpop.f32.mrb[0].mxu0
        %1710 = vmatprep.mubr.bf16.mxu0 %v1550
        %1711 = vmatmul.mubr.bf16.gmra.mrb[0].mxu0 %v1549
        %v1712 = vpop.f32.mrb[0].mxu0
        %v1713 = vadd.f32 %v1620, %v1712
        %v1714 = vpop.f32.mrb[0].mxu0
        %v1715 = vpop.f32.mrb[0].mxu0
        %v1716 = vadd.f32 %v1620, %v1715
        %v1717 = vpop.f32.mrb[0].mxu0
        %1718 = vmatprep.mubr.bf16.mxu0 %v1552
        %1719 = vmatmul.mubr.bf16.gmra.mrb[0].mxu0 %v1551
        %v1720 = vpop.f32.mrb[0].mxu0
        %v1721 = vadd.f32 %v1620, %v1720
        %v1722 = vpop.f32.mrb[0].mxu0
        %v1723 = vpop.f32.mrb[0].mxu0
        %v1724 = vadd.f32 %v1620, %v1723
        %v1725 = vpop.f32.mrb[0].mxu0
        %1726 = vmatprep.mubr.bf16.mxu0 %v1554
        %1727 = vmatmul.mubr.bf16.gmra.mrb[0].mxu0 %v1553
        %v1728 = vpop.f32.mrb[0].mxu0
        %v1729 = vadd.f32 %v1620, %v1728
        %v1730 = vpop.f32.mrb[0].mxu0
        %v1731 = vpop.f32.mrb[0].mxu0
        %v1732 = vadd.f32 %v1620, %v1731
        %v1733 = vpop.f32.mrb[0].mxu0
        %1734 = vmatprep.mubr.bf16.mxu0 %v1556
        %1735 = vmatmul.mubr.bf16.gmra.mrb[0].mxu0 %v1555
        %v1736 = vpop.f32.mrb[0].mxu0
        %v1737 = vadd.f32 %v1620, %v1736
        %v1738 = vpop.f32.mrb[0].mxu0
        %v1739 = vpop.f32.mrb[0].mxu0
        %v1740 = vadd.f32 %v1620, %v1739
        %v1741 = vpop.f32.mrb[0].mxu0
        %1742 = vmatprep.mubr.bf16.mxu0 %v1558
        %1743 = vmatmul.mubr.bf16.gmra.mrb[0].mxu0 %v1557
        %v1744 = vpop.f32.mrb[0].mxu0
        %v1745 = vadd.f32 %v1620, %v1744
        %v1746 = vpop.f32.mrb[0].mxu0
        %v1747 = vpop.f32.mrb[0].mxu0
        %v1748 = vadd.f32 %v1620, %v1747
        %v1749 = vpop.f32.mrb[0].mxu0
        %1750 = vmatprep.mubr.bf16.mxu0 %v1560
        %1751 = vmatmul.mubr.bf16.gmra.mrb[0].mxu0 %v1559
        %v1752 = vpop.f32.mrb[0].mxu0
        %v1753 = vadd.f32 %v1620, %v1752
        %v1754 = vpop.f32.mrb[0].mxu0
        %v1755 = vpop.f32.mrb[0].mxu0
        %v1756 = vadd.f32 %v1620, %v1755
        %v1757 = vpop.f32.mrb[0].mxu0
        %1758 = vmatprep.mubr.bf16.mxu0 %v1562
        %1759 = vmatmul.mubr.bf16.gmra.mrb[0].mxu0 %v1561
        %v1760 = vpop.f32.mrb[0].mxu0
        %v1761 = vadd.f32 %v1620, %v1760
        %v1762 = vpop.f32.mrb[0].mxu0
        %v1763 = vpop.f32.mrb[0].mxu0
        %v1764 = vadd.f32 %v1620, %v1763
        %v1765 = vpop.f32.mrb[0].mxu0
        %1766 = vmatprep.mubr.bf16.mxu0 %v1564
        %1767 = vmatmul.mubr.bf16.gmra.mrb[0].mxu0 %v1563
        %v1768 = vpop.f32.mrb[0].mxu0
        %v1769 = vadd.f32 %v1620, %v1768
        %v1770 = vpop.f32.mrb[0].mxu0
        %v1771 = vpop.f32.mrb[0].mxu0
        %v1772 = vadd.f32 %v1620, %v1771
        %v1773 = vpop.f32.mrb[0].mxu0
        %1774 = vmatprep.mubr.bf16.mxu0 %v1566
        %1775 = vmatmul.mubr.bf16.gmra.mrb[0].mxu0 %v1565
        %v1776 = vpop.f32.mrb[0].mxu0
        %v1777 = vadd.f32 %v1620, %v1776
        %v1778 = vpop.f32.mrb[0].mxu0
        %v1779 = vpop.f32.mrb[0].mxu0
        %v1780 = vadd.f32 %v1620, %v1779
        %v1781 = vpop.f32.mrb[0].mxu0
        %1782 = vdwg.mxu0
        %v1783 = vxor.u32 %v1657, 2147483648
        %v1784 = vxor.u32 %v1660, 2147483648
        %v1785 = vxor.u32 %v1665, 2147483648
        %v1786 = vxor.u32 %v1668, 2147483648
        %v1787 = vxor.u32 %v1673, 2147483648
        %v1788 = vxor.u32 %v1676, 2147483648
        %v1789 = vxor.u32 %v1681, 2147483648
        %v1790 = vxor.u32 %v1684, 2147483648
        %v1791 = vxor.u32 %v1689, 2147483648
        %v1792 = vxor.u32 %v1692, 2147483648
        %v1793 = vxor.u32 %v1697, 2147483648
        %v1794 = vxor.u32 %v1700, 2147483648
        %v1795 = vxor.u32 %v1705, 2147483648
        %v1796 = vxor.u32 %v1708, 2147483648
        %v1797 = vxor.u32 %v1713, 2147483648
        %v1798 = vxor.u32 %v1716, 2147483648
        %v1799 = vxor.u32 %v1721, 2147483648
        %v1800 = vxor.u32 %v1724, 2147483648
        %v1801 = vxor.u32 %v1729, 2147483648
        %v1802 = vxor.u32 %v1732, 2147483648
        %v1803 = vxor.u32 %v1737, 2147483648
        %v1804 = vxor.u32 %v1740, 2147483648
        %v1805 = vxor.u32 %v1745, 2147483648
        %v1806 = vxor.u32 %v1748, 2147483648
        %v1807 = vxor.u32 %v1753, 2147483648
        %v1808 = vxor.u32 %v1756, 2147483648
        %v1809 = vxor.u32 %v1761, 2147483648
        %v1810 = vxor.u32 %v1764, 2147483648
        %v1811 = vxor.u32 %v1769, 2147483648
        %v1812 = vxor.u32 %v1772, 2147483648
        %v1813 = vxor.u32 %v1777, 2147483648
        %v1814 = vxor.u32 %v1780, 2147483648
        %v1815 = vmul.f32 %v1783, 1.442695
        %v1816 = vpow.pop %v1815
        %v1817 = vmul.f32 %v1784, 1.442695
        %v1818 = vpow.pop %v1817
        %v1819 = vmul.f32 %v1785, 1.442695
        %v1820 = vpow.pop %v1819
        %v1821 = vmul.f32 %v1786, 1.442695
        %v1822 = vpow.pop %v1821
        %v1823 = vmul.f32 %v1787, 1.442695
        %v1824 = vpow.pop %v1823
        %v1825 = vmul.f32 %v1788, 1.442695
        %v1826 = vpow.pop %v1825
        %v1827 = vmul.f32 %v1789, 1.442695
        %v1828 = vpow.pop %v1827
        %v1829 = vmul.f32 %v1790, 1.442695
        %v1830 = vpow.pop %v1829
        %v1831 = vmul.f32 %v1791, 1.442695
        %v1832 = vpow.pop %v1831
        %v1833 = vmul.f32 %v1792, 1.442695
        %v1834 = vpow.pop %v1833
        %v1835 = vmul.f32 %v1793, 1.442695
        %v1836 = vpow.pop %v1835
        %v1837 = vmul.f32 %v1794, 1.442695
        %v1838 = vpow.pop %v1837
        %v1839 = vmul.f32 %v1795, 1.442695
        %v1840 = vpow.pop %v1839
        %v1841 = vmul.f32 %v1796, 1.442695
        %v1842 = vpow.pop %v1841
        %v1843 = vmul.f32 %v1797, 1.442695
        %v1844 = vpow.pop %v1843
        %v1845 = vmul.f32 %v1798, 1.442695
        %v1846 = vpow.pop %v1845
        %v1847 = vmul.f32 %v1799, 1.442695
        %v1848 = vpow.pop %v1847
        %v1849 = vmul.f32 %v1800, 1.442695
        %v1850 = vpow.pop %v1849
        %v1851 = vmul.f32 %v1801, 1.442695
        %v1852 = vpow.pop %v1851
        %v1853 = vmul.f32 %v1802, 1.442695
        %v1854 = vpow.pop %v1853
        %v1855 = vmul.f32 %v1803, 1.442695
        %v1856 = vpow.pop %v1855
        %v1857 = vmul.f32 %v1804, 1.442695
        %v1858 = vpow.pop %v1857
        %v1859 = vmul.f32 %v1805, 1.442695
        %v1860 = vpow.pop %v1859
        %v1861 = vmul.f32 %v1806, 1.442695
        %v1862 = vpow.pop %v1861
        %v1863 = vmul.f32 %v1807, 1.442695
        %v1864 = vpow.pop %v1863
        %v1865 = vmul.f32 %v1808, 1.442695
        %v1866 = vpow.pop %v1865
        %v1867 = vmul.f32 %v1809, 1.442695
        %v1868 = vpow.pop %v1867
        %v1869 = vmul.f32 %v1810, 1.442695
        %v1870 = vpow.pop %v1869
        %v1871 = vmul.f32 %v1811, 1.442695
        %v1872 = vpow.pop %v1871
        %v1873 = vmul.f32 %v1812, 1.442695
        %v1874 = vpow.pop %v1873
        %v1875 = vmul.f32 %v1813, 1.442695
        %v1876 = vpow.pop %v1875
        %v1877 = vmul.f32 %v1814, 1.442695
        %v1878 = vpow.pop %v1877
        %v1879 = vadd.f32 %v1816, 1.0
        %v1880 = vadd.f32 %v1818, 1.0
        %v1881 = vadd.f32 %v1820, 1.0
        %v1882 = vadd.f32 %v1822, 1.0
        %v1883 = vadd.f32 %v1824, 1.0
        %v1884 = vadd.f32 %v1826, 1.0
        %v1885 = vadd.f32 %v1828, 1.0
        %v1886 = vadd.f32 %v1830, 1.0
        %v1887 = vadd.f32 %v1832, 1.0
        %v1888 = vadd.f32 %v1834, 1.0
        %v1889 = vadd.f32 %v1836, 1.0
        %v1890 = vadd.f32 %v1838, 1.0
        %v1891 = vadd.f32 %v1840, 1.0
        %v1892 = vadd.f32 %v1842, 1.0
        %v1893 = vadd.f32 %v1844, 1.0
        %v1894 = vadd.f32 %v1846, 1.0
        %v1895 = vadd.f32 %v1848, 1.0
        %v1896 = vadd.f32 %v1850, 1.0
        %v1897 = vadd.f32 %v1852, 1.0
        %v1898 = vadd.f32 %v1854, 1.0
        %v1899 = vadd.f32 %v1856, 1.0
        %v1900 = vadd.f32 %v1858, 1.0
        %v1901 = vadd.f32 %v1860, 1.0
        %v1902 = vadd.f32 %v1862, 1.0
        %v1903 = vadd.f32 %v1864, 1.0
        %v1904 = vadd.f32 %v1866, 1.0
        %v1905 = vadd.f32 %v1868, 1.0
        %v1906 = vadd.f32 %v1870, 1.0
        %v1907 = vadd.f32 %v1872, 1.0
        %v1908 = vadd.f32 %v1874, 1.0
        %v1909 = vadd.f32 %v1876, 1.0
        %v1910 = vadd.f32 %v1878, 1.0
        %v1911 = vrcp.pop %v1879
        %v1912 = vmul.f32 1.0, %v1911
        %v1913 = vrcp.pop %v1880
        %v1914 = vmul.f32 1.0, %v1913
        %v1915 = vrcp.pop %v1881
        %v1916 = vmul.f32 1.0, %v1915
        %v1917 = vrcp.pop %v1882
        %v1918 = vmul.f32 1.0, %v1917
        %v1919 = vrcp.pop %v1883
        %v1920 = vmul.f32 1.0, %v1919
        %v1921 = vrcp.pop %v1884
        %v1922 = vmul.f32 1.0, %v1921
        %v1923 = vrcp.pop %v1885
        %v1924 = vmul.f32 1.0, %v1923
        %v1925 = vrcp.pop %v1886
        %v1926 = vmul.f32 1.0, %v1925
        %v1927 = vrcp.pop %v1887
        %v1928 = vmul.f32 1.0, %v1927
        %v1929 = vrcp.pop %v1888
        %v1930 = vmul.f32 1.0, %v1929
        %v1931 = vrcp.pop %v1889
        %v1932 = vmul.f32 1.0, %v1931
        %v1933 = vrcp.pop %v1890
        %v1934 = vmul.f32 1.0, %v1933
        %v1935 = vrcp.pop %v1891
        %v1936 = vmul.f32 1.0, %v1935
        %v1937 = vrcp.pop %v1892
        %v1938 = vmul.f32 1.0, %v1937
        %v1939 = vrcp.pop %v1893
        %v1940 = vmul.f32 1.0, %v1939
        %v1941 = vrcp.pop %v1894
        %v1942 = vmul.f32 1.0, %v1941
        %v1943 = vrcp.pop %v1895
        %v1944 = vmul.f32 1.0, %v1943
        %v1945 = vrcp.pop %v1896
        %v1946 = vmul.f32 1.0, %v1945
        %v1947 = vrcp.pop %v1897
        %v1948 = vmul.f32 1.0, %v1947
        %v1949 = vrcp.pop %v1898
        %v1950 = vmul.f32 1.0, %v1949
        %v1951 = vrcp.pop %v1899
        %v1952 = vmul.f32 1.0, %v1951
        %v1953 = vrcp.pop %v1900
        %v1954 = vmul.f32 1.0, %v1953
        %v1955 = vrcp.pop %v1901
        %v1956 = vmul.f32 1.0, %v1955
        %v1957 = vrcp.pop %v1902
        %v1958 = vmul.f32 1.0, %v1957
        %v1959 = vrcp.pop %v1903
        %v1960 = vmul.f32 1.0, %v1959
        %v1961 = vrcp.pop %v1904
        %v1962 = vmul.f32 1.0, %v1961
        %v1963 = vrcp.pop %v1905
        %v1964 = vmul.f32 1.0, %v1963
        %v1965 = vrcp.pop %v1906
        %v1966 = vmul.f32 1.0, %v1965
        %v1967 = vrcp.pop %v1907
        %v1968 = vmul.f32 1.0, %v1967
        %v1969 = vrcp.pop %v1908
        %v1970 = vmul.f32 1.0, %v1969
        %v1971 = vrcp.pop %v1909
        %v1972 = vmul.f32 1.0, %v1971
        %v1973 = vrcp.pop %v1910
        %v1974 = vmul.f32 1.0, %v1973
        %v1975 = vpack.c.bf16 %v1914, %v1912
        %v1976 = vpack.c.bf16 %v1918, %v1916
        %v1977 = vpack.c.bf16 %v1922, %v1920
        %v1978 = vpack.c.bf16 %v1926, %v1924
        %v1979 = vpack.c.bf16 %v1930, %v1928
        %v1980 = vpack.c.bf16 %v1934, %v1932
        %v1981 = vpack.c.bf16 %v1938, %v1936
        %v1982 = vpack.c.bf16 %v1942, %v1940
        %v1983 = vpack.c.bf16 %v1946, %v1944
        %v1984 = vpack.c.bf16 %v1950, %v1948
        %v1985 = vpack.c.bf16 %v1954, %v1952
        %v1986 = vpack.c.bf16 %v1958, %v1956
        %v1987 = vpack.c.bf16 %v1962, %v1960
        %v1988 = vpack.c.bf16 %v1966, %v1964
        %v1989 = vpack.c.bf16 %v1970, %v1968
        %v1990 = vpack.c.bf16 %v1974, %v1972
        %v1991 = vld [vmem:[#allocation9] sm:$0xff]
        %v1992 = vld [vmem:[#allocation9 + $0x8] sm:$0xff]
        %v1993 = vld [vmem:[#allocation9 + $0x10] sm:$0xff]
        %v1994 = vld [vmem:[#allocation9 + $0x18] sm:$0xff]
        %v1995 = vld [vmem:[#allocation9 + $0x20] sm:$0xff]
        %v1996 = vld [vmem:[#allocation9 + $0x28] sm:$0xff]
        %v1997 = vld [vmem:[#allocation9 + $0x30] sm:$0xff]
        %v1998 = vld [vmem:[#allocation9 + $0x38] sm:$0xff]
        %v1999 = vld [vmem:[#allocation9 + $0x40] sm:$0xff]
        %v2000 = vld [vmem:[#allocation9 + $0x48] sm:$0xff]
        %v2001 = vld [vmem:[#allocation9 + $0x50] sm:$0xff]
        %v2002 = vld [vmem:[#allocation9 + $0x58] sm:$0xff]
        %v2003 = vld [vmem:[#allocation9 + $0x60] sm:$0xff]
        %v2004 = vld [vmem:[#allocation9 + $0x68] sm:$0xff]
        %v2005 = vld [vmem:[#allocation9 + $0x70] sm:$0xff]
        %v2006 = vld [vmem:[#allocation9 + $0x78] sm:$0xff]
        %v2007 = vld [vmem:[#allocation9 + $0x80] sm:$0xff]
        %v2008 = vld [vmem:[#allocation9 + $0x88] sm:$0xff]
        %v2009 = vld [vmem:[#allocation9 + $0x90] sm:$0xff]
        %v2010 = vld [vmem:[#allocation9 + $0x98] sm:$0xff]
        %v2011 = vld [vmem:[#allocation9 + $0xa0] sm:$0xff]
        %v2012 = vld [vmem:[#allocation9 + $0xa8] sm:$0xff]
        %v2013 = vld [vmem:[#allocation9 + $0xb0] sm:$0xff]
        %v2014 = vld [vmem:[#allocation9 + $0xb8] sm:$0xff]
        %v2015 = vld [vmem:[#allocation9 + $0xc0] sm:$0xff]
        %v2016 = vld [vmem:[#allocation9 + $0xc8] sm:$0xff]
        %v2017 = vld [vmem:[#allocation9 + $0xd0] sm:$0xff]
        %v2018 = vld [vmem:[#allocation9 + $0xd8] sm:$0xff]
        %v2019 = vld [vmem:[#allocation9 + $0xe0] sm:$0xff]
        %v2020 = vld [vmem:[#allocation9 + $0xe8] sm:$0xff]
        %v2021 = vld [vmem:[#allocation9 + $0xf0] sm:$0xff]
        %v2022 = vld [vmem:[#allocation9 + $0xf8] sm:$0xff]
        %v2023 = vpack.c.bf16 %v1993, %v1991
        %v2024 = vpack.c.bf16 %v1994, %v1992
        %v2025 = vpack.c.bf16 %v1997, %v1995
        %v2026 = vpack.c.bf16 %v1998, %v1996
        %v2027 = vpack.c.bf16 %v2001, %v1999
        %v2028 = vpack.c.bf16 %v2002, %v2000
        %v2029 = vpack.c.bf16 %v2005, %v2003
        %v2030 = vpack.c.bf16 %v2006, %v2004
        %v2031 = vpack.c.bf16 %v2009, %v2007
        %v2032 = vpack.c.bf16 %v2010, %v2008
        %v2033 = vpack.c.bf16 %v2013, %v2011
        %v2034 = vpack.c.bf16 %v2014, %v2012
        %v2035 = vpack.c.bf16 %v2017, %v2015
        %v2036 = vpack.c.bf16 %v2018, %v2016
        %v2037 = vpack.c.bf16 %v2021, %v2019
        %v2038 = vpack.c.bf16 %v2022, %v2020
        %v2039 = vld [vmem:[%s5] sm:$0x3]
        %v2041 = vlaneseq
        %v2042 = vshrl.u32 %v2041, 7
        %v2043 = vsub.s32 0, %v2042
        %v2044 = vrot.slane %v2039, %v2043
        %v2045 = vlaneseq
        %v2046 = vshrl.u32 %v2045, 7
        %v2047 = vsub.s32 1, %v2046
        %v2048 = vrot.slane %v2039, %v2047
        %2051 = vmatprep.subr.bf16.mxu0 %v2024
        %2052 = vmatpush1.bf16.msra.mxu0 %v2023
        %2053 = vmatprep.subr.bf16.mxu0 %v2026
        %2054 = vmatpush1.bf16.msra.mxu0 %v2025
        %2055 = vmatprep.subr.bf16.mxu0 %v2028
        %2056 = vmatpush1.bf16.msra.mxu0 %v2027
        %2057 = vmatprep.subr.bf16.mxu0 %v2030
        %2058 = vmatpush1.bf16.msra.mxu0 %v2029
        %2059 = vmatprep.subr.bf16.mxu0 %v2032
        %2060 = vmatpush1.bf16.msra.mxu0 %v2031
        %2061 = vmatprep.subr.bf16.mxu0 %v2034
        %2062 = vmatpush1.bf16.msra.mxu0 %v2033
        %2063 = vmatprep.subr.bf16.mxu0 %v2036
        %2064 = vmatpush1.bf16.msra.mxu0 %v2035
        %2065 = vmatprep.subr.bf16.mxu0 %v2038
        %2066 = vmatpush1.bf16.msra.mxu0 %v2037
        %2067 = vmatprep.subr.bf16.mxu0 0
        %2068 = vmatpush1.bf16.msra.mxu0 0
        %2069 = vmatprep.subr.bf16.mxu0 0
        %2070 = vmatpush1.bf16.msra.mxu0 0
        %2071 = vmatprep.subr.bf16.mxu0 0
        %2072 = vmatpush1.bf16.msra.mxu0 0
        %2073 = vmatprep.subr.bf16.mxu0 0
        %2074 = vmatpush1.bf16.msra.mxu0 0
        %2075 = vmatprep.subr.bf16.mxu0 0
        %2076 = vmatpush1.bf16.msra.mxu0 0
        %2077 = vmatprep.subr.bf16.mxu0 0
        %2078 = vmatpush1.bf16.msra.mxu0 0
        %2079 = vmatprep.subr.bf16.mxu0 0
        %2080 = vmatpush1.bf16.msra.mxu0 0
        %2081 = vmatprep.subr.bf16.mxu0 0
        %2082 = vmatpush1.bf16.msra.mxu0 0
        %2083 = vmatprep.mubr.bf16.mxu0 0
        %2084 = vmatmul.mubr.bf16.gmra.mrb[0].mxu0 %v1975
        %v2085 = vpop.f32.mrb[0].mxu0
        %v2086 = vadd.f32 %v2044, %v2085
        %v2087 = vpop.f32.mrb[0].mxu0
        %v2088 = vadd.f32 %v2048, %v2087
        %v2089 = vpop.f32.mrb[0].mxu0
        %v2090 = vadd.f32 %v2044, %v2089
        %v2091 = vpop.f32.mrb[0].mxu0
        %v2092 = vadd.f32 %v2048, %v2091
        %2093 = vmatprep.mubr.bf16.mxu0 0
        %2094 = vmatmul.mubr.bf16.gmra.mrb[0].mxu0 %v1976
        %v2095 = vpop.f32.mrb[0].mxu0
        %v2096 = vadd.f32 %v2044, %v2095
        %v2097 = vpop.f32.mrb[0].mxu0
        %v2098 = vadd.f32 %v2048, %v2097
        %v2099 = vpop.f32.mrb[0].mxu0
        %v2100 = vadd.f32 %v2044, %v2099
        %v2101 = vpop.f32.mrb[0].mxu0
        %v2102 = vadd.f32 %v2048, %v2101
        %2103 = vmatprep.mubr.bf16.mxu0 0
        %2104 = vmatmul.mubr.bf16.gmra.mrb[0].mxu0 %v1977
        %v2105 = vpop.f32.mrb[0].mxu0
        %v2106 = vadd.f32 %v2044, %v2105
        %v2107 = vpop.f32.mrb[0].mxu0
        %v2108 = vadd.f32 %v2048, %v2107
        %v2109 = vpop.f32.mrb[0].mxu0
        %v2110 = vadd.f32 %v2044, %v2109
        %v2111 = vpop.f32.mrb[0].mxu0
        %v2112 = vadd.f32 %v2048, %v2111
        %2113 = vmatprep.mubr.bf16.mxu0 0
        %2114 = vmatmul.mubr.bf16.gmra.mrb[0].mxu0 %v1978
        %v2115 = vpop.f32.mrb[0].mxu0
        %v2116 = vadd.f32 %v2044, %v2115
        %v2117 = vpop.f32.mrb[0].mxu0
        %v2118 = vadd.f32 %v2048, %v2117
        %v2119 = vpop.f32.mrb[0].mxu0
        %v2120 = vadd.f32 %v2044, %v2119
        %v2121 = vpop.f32.mrb[0].mxu0
        %v2122 = vadd.f32 %v2048, %v2121
        %2123 = vmatprep.mubr.bf16.mxu0 0
        %2124 = vmatmul.mubr.bf16.gmra.mrb[0].mxu0 %v1979
        %v2125 = vpop.f32.mrb[0].mxu0
        %v2126 = vadd.f32 %v2044, %v2125
        %v2127 = vpop.f32.mrb[0].mxu0
        %v2128 = vadd.f32 %v2048, %v2127
        %v2129 = vpop.f32.mrb[0].mxu0
        %v2130 = vadd.f32 %v2044, %v2129
        %v2131 = vpop.f32.mrb[0].mxu0
        %v2132 = vadd.f32 %v2048, %v2131
        %2133 = vmatprep.mubr.bf16.mxu0 0
        %2134 = vmatmul.mubr.bf16.gmra.mrb[0].mxu0 %v1980
        %v2135 = vpop.f32.mrb[0].mxu0
        %v2136 = vadd.f32 %v2044, %v2135
        %v2137 = vpop.f32.mrb[0].mxu0
        %v2138 = vadd.f32 %v2048, %v2137
        %v2139 = vpop.f32.mrb[0].mxu0
        %v2140 = vadd.f32 %v2044, %v2139
        %v2141 = vpop.f32.mrb[0].mxu0
        %v2142 = vadd.f32 %v2048, %v2141
        %2143 = vmatprep.mubr.bf16.mxu0 0
        %2144 = vmatmul.mubr.bf16.gmra.mrb[0].mxu0 %v1981
        %v2145 = vpop.f32.mrb[0].mxu0
        %v2146 = vadd.f32 %v2044, %v2145
        %v2147 = vpop.f32.mrb[0].mxu0
        %v2148 = vadd.f32 %v2048, %v2147
        %v2149 = vpop.f32.mrb[0].mxu0
        %v2150 = vadd.f32 %v2044, %v2149
        %v2151 = vpop.f32.mrb[0].mxu0
        %v2152 = vadd.f32 %v2048, %v2151
        %2153 = vmatprep.mubr.bf16.mxu0 0
        %2154 = vmatmul.mubr.bf16.gmra.mrb[0].mxu0 %v1982
        %v2155 = vpop.f32.mrb[0].mxu0
        %v2156 = vadd.f32 %v2044, %v2155
        %v2157 = vpop.f32.mrb[0].mxu0
        %v2158 = vadd.f32 %v2048, %v2157
        %v2159 = vpop.f32.mrb[0].mxu0
        %v2160 = vadd.f32 %v2044, %v2159
        %v2161 = vpop.f32.mrb[0].mxu0
        %v2162 = vadd.f32 %v2048, %v2161
        %2163 = vmatprep.mubr.bf16.mxu0 0
        %2164 = vmatmul.mubr.bf16.gmra.mrb[0].mxu0 %v1983
        %v2165 = vpop.f32.mrb[0].mxu0
        %v2166 = vadd.f32 %v2044, %v2165
        %v2167 = vpop.f32.mrb[0].mxu0
        %v2168 = vadd.f32 %v2048, %v2167
        %v2169 = vpop.f32.mrb[0].mxu0
        %v2170 = vadd.f32 %v2044, %v2169
        %v2171 = vpop.f32.mrb[0].mxu0
        %v2172 = vadd.f32 %v2048, %v2171
        %2173 = vmatprep.mubr.bf16.mxu0 0
        %2174 = vmatmul.mubr.bf16.gmra.mrb[0].mxu0 %v1984
        %v2175 = vpop.f32.mrb[0].mxu0
        %v2176 = vadd.f32 %v2044, %v2175
        %v2177 = vpop.f32.mrb[0].mxu0
        %v2178 = vadd.f32 %v2048, %v2177
        %v2179 = vpop.f32.mrb[0].mxu0
        %v2180 = vadd.f32 %v2044, %v2179
        %v2181 = vpop.f32.mrb[0].mxu0
        %v2182 = vadd.f32 %v2048, %v2181
        %2183 = vmatprep.mubr.bf16.mxu0 0
        %2184 = vmatmul.mubr.bf16.gmra.mrb[0].mxu0 %v1985
        %v2185 = vpop.f32.mrb[0].mxu0
        %v2186 = vadd.f32 %v2044, %v2185
        %v2187 = vpop.f32.mrb[0].mxu0
        %v2188 = vadd.f32 %v2048, %v2187
        %v2189 = vpop.f32.mrb[0].mxu0
        %v2190 = vadd.f32 %v2044, %v2189
        %v2191 = vpop.f32.mrb[0].mxu0
        %v2192 = vadd.f32 %v2048, %v2191
        %2193 = vmatprep.mubr.bf16.mxu0 0
        %2194 = vmatmul.mubr.bf16.gmra.mrb[0].mxu0 %v1986
        %v2195 = vpop.f32.mrb[0].mxu0
        %v2196 = vadd.f32 %v2044, %v2195
        %v2197 = vpop.f32.mrb[0].mxu0
        %v2198 = vadd.f32 %v2048, %v2197
        %v2199 = vpop.f32.mrb[0].mxu0
        %v2200 = vadd.f32 %v2044, %v2199
        %v2201 = vpop.f32.mrb[0].mxu0
        %v2202 = vadd.f32 %v2048, %v2201
        %2203 = vmatprep.mubr.bf16.mxu0 0
        %2204 = vmatmul.mubr.bf16.gmra.mrb[0].mxu0 %v1987
        %v2205 = vpop.f32.mrb[0].mxu0
        %v2206 = vadd.f32 %v2044, %v2205
        %v2207 = vpop.f32.mrb[0].mxu0
        %v2208 = vadd.f32 %v2048, %v2207
        %v2209 = vpop.f32.mrb[0].mxu0
        %v2210 = vadd.f32 %v2044, %v2209
        %v2211 = vpop.f32.mrb[0].mxu0
        %v2212 = vadd.f32 %v2048, %v2211
        %2213 = vmatprep.mubr.bf16.mxu0 0
        %2214 = vmatmul.mubr.bf16.gmra.mrb[0].mxu0 %v1988
        %v2215 = vpop.f32.mrb[0].mxu0
        %v2216 = vadd.f32 %v2044, %v2215
        %v2217 = vpop.f32.mrb[0].mxu0
        %v2218 = vadd.f32 %v2048, %v2217
        %v2219 = vpop.f32.mrb[0].mxu0
        %v2220 = vadd.f32 %v2044, %v2219
        %v2221 = vpop.f32.mrb[0].mxu0
        %v2222 = vadd.f32 %v2048, %v2221
        %2223 = vmatprep.mubr.bf16.mxu0 0
        %2224 = vmatmul.mubr.bf16.gmra.mrb[0].mxu0 %v1989
        %v2225 = vpop.f32.mrb[0].mxu0
        %v2226 = vadd.f32 %v2044, %v2225
        %v2227 = vpop.f32.mrb[0].mxu0
        %v2228 = vadd.f32 %v2048, %v2227
        %v2229 = vpop.f32.mrb[0].mxu0
        %v2230 = vadd.f32 %v2044, %v2229
        %v2231 = vpop.f32.mrb[0].mxu0
        %v2232 = vadd.f32 %v2048, %v2231
        %2233 = vmatprep.mubr.bf16.mxu0 0
        %2234 = vmatmul.mubr.bf16.gmra.mrb[0].mxu0 %v1990
        %v2235 = vpop.f32.mrb[0].mxu0
        %v2236 = vadd.f32 %v2044, %v2235
        %v2237 = vpop.f32.mrb[0].mxu0
        %v2238 = vadd.f32 %v2048, %v2237
        %v2239 = vpop.f32.mrb[0].mxu0
        %v2240 = vadd.f32 %v2044, %v2239
        %v2241 = vpop.f32.mrb[0].mxu0
        %v2242 = vadd.f32 %v2048, %v2241
        %2243 = vdwg.mxu0
        %v2244 = vxor.u32 %v2086, 2147483648
        %v2245 = vxor.u32 %v2088, 2147483648
        %v2246 = vxor.u32 %v2090, 2147483648
        %v2247 = vxor.u32 %v2092, 2147483648
        %v2248 = vxor.u32 %v2096, 2147483648
        %v2249 = vxor.u32 %v2098, 2147483648
        %v2250 = vxor.u32 %v2100, 2147483648
        %v2251 = vxor.u32 %v2102, 2147483648
        %v2252 = vxor.u32 %v2106, 2147483648
        %v2253 = vxor.u32 %v2108, 2147483648
        %v2254 = vxor.u32 %v2110, 2147483648
        %v2255 = vxor.u32 %v2112, 2147483648
        %v2256 = vxor.u32 %v2116, 2147483648
        %v2257 = vxor.u32 %v2118, 2147483648
        %v2258 = vxor.u32 %v2120, 2147483648
        %v2259 = vxor.u32 %v2122, 2147483648
        %v2260 = vxor.u32 %v2126, 2147483648
        %v2261 = vxor.u32 %v2128, 2147483648
        %v2262 = vxor.u32 %v2130, 2147483648
        %v2263 = vxor.u32 %v2132, 2147483648
        %v2264 = vxor.u32 %v2136, 2147483648
        %v2265 = vxor.u32 %v2138, 2147483648
        %v2266 = vxor.u32 %v2140, 2147483648
        %v2267 = vxor.u32 %v2142, 2147483648
        %v2268 = vxor.u32 %v2146, 2147483648
        %v2269 = vxor.u32 %v2148, 2147483648
        %v2270 = vxor.u32 %v2150, 2147483648
        %v2271 = vxor.u32 %v2152, 2147483648
        %v2272 = vxor.u32 %v2156, 2147483648
        %v2273 = vxor.u32 %v2158, 2147483648
        %v2274 = vxor.u32 %v2160, 2147483648
        %v2275 = vxor.u32 %v2162, 2147483648
        %v2276 = vxor.u32 %v2166, 2147483648
        %v2277 = vxor.u32 %v2168, 2147483648
        %v2278 = vxor.u32 %v2170, 2147483648
        %v2279 = vxor.u32 %v2172, 2147483648
        %v2280 = vxor.u32 %v2176, 2147483648
        %v2281 = vxor.u32 %v2178, 2147483648
        %v2282 = vxor.u32 %v2180, 2147483648
        %v2283 = vxor.u32 %v2182, 2147483648
        %v2284 = vxor.u32 %v2186, 2147483648
        %v2285 = vxor.u32 %v2188, 2147483648
        %v2286 = vxor.u32 %v2190, 2147483648
        %v2287 = vxor.u32 %v2192, 2147483648
        %v2288 = vxor.u32 %v2196, 2147483648
        %v2289 = vxor.u32 %v2198, 2147483648
        %v2290 = vxor.u32 %v2200, 2147483648
        %v2291 = vxor.u32 %v2202, 2147483648
        %v2292 = vxor.u32 %v2206, 2147483648
        %v2293 = vxor.u32 %v2208, 2147483648
        %v2294 = vxor.u32 %v2210, 2147483648
        %v2295 = vxor.u32 %v2212, 2147483648
        %v2296 = vxor.u32 %v2216, 2147483648
        %v2297 = vxor.u32 %v2218, 2147483648
        %v2298 = vxor.u32 %v2220, 2147483648
        %v2299 = vxor.u32 %v2222, 2147483648
        %v2300 = vxor.u32 %v2226, 2147483648
        %v2301 = vxor.u32 %v2228, 2147483648
        %v2302 = vxor.u32 %v2230, 2147483648
        %v2303 = vxor.u32 %v2232, 2147483648
        %v2304 = vxor.u32 %v2236, 2147483648
        %v2305 = vxor.u32 %v2238, 2147483648
        %v2306 = vxor.u32 %v2240, 2147483648
        %v2307 = vxor.u32 %v2242, 2147483648
        %v2308 = vmul.f32 %v2244, 1.442695
        %v2309 = vpow.pop %v2308
        %v2310 = vmul.f32 %v2245, 1.442695
        %v2311 = vpow.pop %v2310
        %v2312 = vmul.f32 %v2246, 1.442695
        %v2313 = vpow.pop %v2312
        %v2314 = vmul.f32 %v2247, 1.442695
        %v2315 = vpow.pop %v2314
        %v2316 = vmul.f32 %v2248, 1.442695
        %v2317 = vpow.pop %v2316
        %v2318 = vmul.f32 %v2249, 1.442695
        %v2319 = vpow.pop %v2318
        %v2320 = vmul.f32 %v2250, 1.442695
        %v2321 = vpow.pop %v2320
        %v2322 = vmul.f32 %v2251, 1.442695
        %v2323 = vpow.pop %v2322
        %v2324 = vmul.f32 %v2252, 1.442695
        %v2325 = vpow.pop %v2324
        %v2326 = vmul.f32 %v2253, 1.442695
        %v2327 = vpow.pop %v2326
        %v2328 = vmul.f32 %v2254, 1.442695
        %v2329 = vpow.pop %v2328
        %v2330 = vmul.f32 %v2255, 1.442695
        %v2331 = vpow.pop %v2330
        %v2332 = vmul.f32 %v2256, 1.442695
        %v2333 = vpow.pop %v2332
        %v2334 = vmul.f32 %v2257, 1.442695
        %v2335 = vpow.pop %v2334
        %v2336 = vmul.f32 %v2258, 1.442695
        %v2337 = vpow.pop %v2336
        %v2338 = vmul.f32 %v2259, 1.442695
        %v2339 = vpow.pop %v2338
        %v2340 = vmul.f32 %v2260, 1.442695
        %v2341 = vpow.pop %v2340
        %v2342 = vmul.f32 %v2261, 1.442695
        %v2343 = vpow.pop %v2342
        %v2344 = vmul.f32 %v2262, 1.442695
        %v2345 = vpow.pop %v2344
        %v2346 = vmul.f32 %v2263, 1.442695
        %v2347 = vpow.pop %v2346
        %v2348 = vmul.f32 %v2264, 1.442695
        %v2349 = vpow.pop %v2348
        %v2350 = vmul.f32 %v2265, 1.442695
        %v2351 = vpow.pop %v2350
        %v2352 = vmul.f32 %v2266, 1.442695
        %v2353 = vpow.pop %v2352
        %v2354 = vmul.f32 %v2267, 1.442695
        %v2355 = vpow.pop %v2354
        %v2356 = vmul.f32 %v2268, 1.442695
        %v2357 = vpow.pop %v2356
        %v2358 = vmul.f32 %v2269, 1.442695
        %v2359 = vpow.pop %v2358
        %v2360 = vmul.f32 %v2270, 1.442695
        %v2361 = vpow.pop %v2360
        %v2362 = vmul.f32 %v2271, 1.442695
        %v2363 = vpow.pop %v2362
        %v2364 = vmul.f32 %v2272, 1.442695
        %v2365 = vpow.pop %v2364
        %v2366 = vmul.f32 %v2273, 1.442695
        %v2367 = vpow.pop %v2366
        %v2368 = vmul.f32 %v2274, 1.442695
        %v2369 = vpow.pop %v2368
        %v2370 = vmul.f32 %v2275, 1.442695
        %v2371 = vpow.pop %v2370
        %v2372 = vmul.f32 %v2276, 1.442695
        %v2373 = vpow.pop %v2372
        %v2374 = vmul.f32 %v2277, 1.442695
        %v2375 = vpow.pop %v2374
        %v2376 = vmul.f32 %v2278, 1.442695
        %v2377 = vpow.pop %v2376
        %v2378 = vmul.f32 %v2279, 1.442695
        %v2379 = vpow.pop %v2378
        %v2380 = vmul.f32 %v2280, 1.442695
        %v2381 = vpow.pop %v2380
        %v2382 = vmul.f32 %v2281, 1.442695
        %v2383 = vpow.pop %v2382
        %v2384 = vmul.f32 %v2282, 1.442695
        %v2385 = vpow.pop %v2384
        %v2386 = vmul.f32 %v2283, 1.442695
        %v2387 = vpow.pop %v2386
        %v2388 = vmul.f32 %v2284, 1.442695
        %v2389 = vpow.pop %v2388
        %v2390 = vmul.f32 %v2285, 1.442695
        %v2391 = vpow.pop %v2390
        %v2392 = vmul.f32 %v2286, 1.442695
        %v2393 = vpow.pop %v2392
        %v2394 = vmul.f32 %v2287, 1.442695
        %v2395 = vpow.pop %v2394
        %v2396 = vmul.f32 %v2288, 1.442695
        %v2397 = vpow.pop %v2396
        %v2398 = vmul.f32 %v2289, 1.442695
        %v2399 = vpow.pop %v2398
        %v2400 = vmul.f32 %v2290, 1.442695
        %v2401 = vpow.pop %v2400
        %v2402 = vmul.f32 %v2291, 1.442695
        %v2403 = vpow.pop %v2402
        %v2404 = vmul.f32 %v2292, 1.442695
        %v2405 = vpow.pop %v2404
        %v2406 = vmul.f32 %v2293, 1.442695
        %v2407 = vpow.pop %v2406
        %v2408 = vmul.f32 %v2294, 1.442695
        %v2409 = vpow.pop %v2408
        %v2410 = vmul.f32 %v2295, 1.442695
        %v2411 = vpow.pop %v2410
        %v2412 = vmul.f32 %v2296, 1.442695
        %v2413 = vpow.pop %v2412
        %v2414 = vmul.f32 %v2297, 1.442695
        %v2415 = vpow.pop %v2414
        %v2416 = vmul.f32 %v2298, 1.442695
        %v2417 = vpow.pop %v2416
        %v2418 = vmul.f32 %v2299, 1.442695
        %v2419 = vpow.pop %v2418
        %v2420 = vmul.f32 %v2300, 1.442695
        %v2421 = vpow.pop %v2420
        %v2422 = vmul.f32 %v2301, 1.442695
        %v2423 = vpow.pop %v2422
        %v2424 = vmul.f32 %v2302, 1.442695
        %v2425 = vpow.pop %v2424
        %v2426 = vmul.f32 %v2303, 1.442695
        %v2427 = vpow.pop %v2426
        %v2428 = vmul.f32 %v2304, 1.442695
        %v2429 = vpow.pop %v2428
        %v2430 = vmul.f32 %v2305, 1.442695
        %v2431 = vpow.pop %v2430
        %v2432 = vmul.f32 %v2306, 1.442695
        %v2433 = vpow.pop %v2432
        %v2434 = vmul.f32 %v2307, 1.442695
        %v2435 = vpow.pop %v2434
        %v2436 = vadd.f32 %v2309, 1.0
        %v2437 = vadd.f32 %v2311, 1.0
        %v2438 = vadd.f32 %v2313, 1.0
        %v2439 = vadd.f32 %v2315, 1.0
        %v2440 = vadd.f32 %v2317, 1.0
        %v2441 = vadd.f32 %v2319, 1.0
        %v2442 = vadd.f32 %v2321, 1.0
        %v2443 = vadd.f32 %v2323, 1.0
        %v2444 = vadd.f32 %v2325, 1.0
        %v2445 = vadd.f32 %v2327, 1.0
        %v2446 = vadd.f32 %v2329, 1.0
        %v2447 = vadd.f32 %v2331, 1.0
        %v2448 = vadd.f32 %v2333, 1.0
        %v2449 = vadd.f32 %v2335, 1.0
        %v2450 = vadd.f32 %v2337, 1.0
        %v2451 = vadd.f32 %v2339, 1.0
        %v2452 = vadd.f32 %v2341, 1.0
        %v2453 = vadd.f32 %v2343, 1.0
        %v2454 = vadd.f32 %v2345, 1.0
        %v2455 = vadd.f32 %v2347, 1.0
        %v2456 = vadd.f32 %v2349, 1.0
        %v2457 = vadd.f32 %v2351, 1.0
        %v2458 = vadd.f32 %v2353, 1.0
        %v2459 = vadd.f32 %v2355, 1.0
        %v2460 = vadd.f32 %v2357, 1.0
        %v2461 = vadd.f32 %v2359, 1.0
        %v2462 = vadd.f32 %v2361, 1.0
        %v2463 = vadd.f32 %v2363, 1.0
        %v2464 = vadd.f32 %v2365, 1.0
        %v2465 = vadd.f32 %v2367, 1.0
        %v2466 = vadd.f32 %v2369, 1.0
        %v2467 = vadd.f32 %v2371, 1.0
        %v2468 = vadd.f32 %v2373, 1.0
        %v2469 = vadd.f32 %v2375, 1.0
        %v2470 = vadd.f32 %v2377, 1.0
        %v2471 = vadd.f32 %v2379, 1.0
        %v2472 = vadd.f32 %v2381, 1.0
        %v2473 = vadd.f32 %v2383, 1.0
        %v2474 = vadd.f32 %v2385, 1.0
        %v2475 = vadd.f32 %v2387, 1.0
        %v2476 = vadd.f32 %v2389, 1.0
        %v2477 = vadd.f32 %v2391, 1.0
        %v2478 = vadd.f32 %v2393, 1.0
        %v2479 = vadd.f32 %v2395, 1.0
        %v2480 = vadd.f32 %v2397, 1.0
        %v2481 = vadd.f32 %v2399, 1.0
        %v2482 = vadd.f32 %v2401, 1.0
        %v2483 = vadd.f32 %v2403, 1.0
        %v2484 = vadd.f32 %v2405, 1.0
        %v2485 = vadd.f32 %v2407, 1.0
        %v2486 = vadd.f32 %v2409, 1.0
        %v2487 = vadd.f32 %v2411, 1.0
        %v2488 = vadd.f32 %v2413, 1.0
        %v2489 = vadd.f32 %v2415, 1.0
        %v2490 = vadd.f32 %v2417, 1.0
        %v2491 = vadd.f32 %v2419, 1.0
        %v2492 = vadd.f32 %v2421, 1.0
        %v2493 = vadd.f32 %v2423, 1.0
        %v2494 = vadd.f32 %v2425, 1.0
        %v2495 = vadd.f32 %v2427, 1.0
        %v2496 = vadd.f32 %v2429, 1.0
        %v2497 = vadd.f32 %v2431, 1.0
        %v2498 = vadd.f32 %v2433, 1.0
        %v2499 = vadd.f32 %v2435, 1.0
        %v2500 = vrcp.pop %v2436
        %v2501 = vmul.f32 1.0, %v2500
        %v2502 = vrcp.pop %v2437
        %v2503 = vmul.f32 1.0, %v2502
        %v2504 = vrcp.pop %v2438
        %v2505 = vmul.f32 1.0, %v2504
        %v2506 = vrcp.pop %v2439
        %v2507 = vmul.f32 1.0, %v2506
        %v2508 = vrcp.pop %v2440
        %v2509 = vmul.f32 1.0, %v2508
        %v2510 = vrcp.pop %v2441
        %v2511 = vmul.f32 1.0, %v2510
        %v2512 = vrcp.pop %v2442
        %v2513 = vmul.f32 1.0, %v2512
        %v2514 = vrcp.pop %v2443
        %v2515 = vmul.f32 1.0, %v2514
        %v2516 = vrcp.pop %v2444
        %v2517 = vmul.f32 1.0, %v2516
        %v2518 = vrcp.pop %v2445
        %v2519 = vmul.f32 1.0, %v2518
        %v2520 = vrcp.pop %v2446
        %v2521 = vmul.f32 1.0, %v2520
        %v2522 = vrcp.pop %v2447
        %v2523 = vmul.f32 1.0, %v2522
        %v2524 = vrcp.pop %v2448
        %v2525 = vmul.f32 1.0, %v2524
        %v2526 = vrcp.pop %v2449
        %v2527 = vmul.f32 1.0, %v2526
        %v2528 = vrcp.pop %v2450
        %v2529 = vmul.f32 1.0, %v2528
        %v2530 = vrcp.pop %v2451
        %v2531 = vmul.f32 1.0, %v2530
        %v2532 = vrcp.pop %v2452
        %v2533 = vmul.f32 1.0, %v2532
        %v2534 = vrcp.pop %v2453
        %v2535 = vmul.f32 1.0, %v2534
        %v2536 = vrcp.pop %v2454
        %v2537 = vmul.f32 1.0, %v2536
        %v2538 = vrcp.pop %v2455
        %v2539 = vmul.f32 1.0, %v2538
        %v2540 = vrcp.pop %v2456
        %v2541 = vmul.f32 1.0, %v2540
        %v2542 = vrcp.pop %v2457
        %v2543 = vmul.f32 1.0, %v2542
        %v2544 = vrcp.pop %v2458
        %v2545 = vmul.f32 1.0, %v2544
        %v2546 = vrcp.pop %v2459
        %v2547 = vmul.f32 1.0, %v2546
        %v2548 = vrcp.pop %v2460
        %v2549 = vmul.f32 1.0, %v2548
        %v2550 = vrcp.pop %v2461
        %v2551 = vmul.f32 1.0, %v2550
        %v2552 = vrcp.pop %v2462
        %v2553 = vmul.f32 1.0, %v2552
        %v2554 = vrcp.pop %v2463
        %v2555 = vmul.f32 1.0, %v2554
        %v2556 = vrcp.pop %v2464
        %v2557 = vmul.f32 1.0, %v2556
        %v2558 = vrcp.pop %v2465
        %v2559 = vmul.f32 1.0, %v2558
        %v2560 = vrcp.pop %v2466
        %v2561 = vmul.f32 1.0, %v2560
        %v2562 = vrcp.pop %v2467
        %v2563 = vmul.f32 1.0, %v2562
        %v2564 = vrcp.pop %v2468
        %v2565 = vmul.f32 1.0, %v2564
        %v2566 = vrcp.pop %v2469
        %v2567 = vmul.f32 1.0, %v2566
        %v2568 = vrcp.pop %v2470
        %v2569 = vmul.f32 1.0, %v2568
        %v2570 = vrcp.pop %v2471
        %v2571 = vmul.f32 1.0, %v2570
        %v2572 = vrcp.pop %v2472
        %v2573 = vmul.f32 1.0, %v2572
        %v2574 = vrcp.pop %v2473
        %v2575 = vmul.f32 1.0, %v2574
        %v2576 = vrcp.pop %v2474
        %v2577 = vmul.f32 1.0, %v2576
        %v2578 = vrcp.pop %v2475
        %v2579 = vmul.f32 1.0, %v2578
        %v2580 = vrcp.pop %v2476
        %v2581 = vmul.f32 1.0, %v2580
        %v2582 = vrcp.pop %v2477
        %v2583 = vmul.f32 1.0, %v2582
        %v2584 = vrcp.pop %v2478
        %v2585 = vmul.f32 1.0, %v2584
        %v2586 = vrcp.pop %v2479
        %v2587 = vmul.f32 1.0, %v2586
        %v2588 = vrcp.pop %v2480
        %v2589 = vmul.f32 1.0, %v2588
        %v2590 = vrcp.pop %v2481
        %v2591 = vmul.f32 1.0, %v2590
        %v2592 = vrcp.pop %v2482
        %v2593 = vmul.f32 1.0, %v2592
        %v2594 = vrcp.pop %v2483
        %v2595 = vmul.f32 1.0, %v2594
        %v2596 = vrcp.pop %v2484
        %v2597 = vmul.f32 1.0, %v2596
        %v2598 = vrcp.pop %v2485
        %v2599 = vmul.f32 1.0, %v2598
        %v2600 = vrcp.pop %v2486
        %v2601 = vmul.f32 1.0, %v2600
        %v2602 = vrcp.pop %v2487
        %v2603 = vmul.f32 1.0, %v2602
        %v2604 = vrcp.pop %v2488
        %v2605 = vmul.f32 1.0, %v2604
        %v2606 = vrcp.pop %v2489
        %v2607 = vmul.f32 1.0, %v2606
        %v2608 = vrcp.pop %v2490
        %v2609 = vmul.f32 1.0, %v2608
        %v2610 = vrcp.pop %v2491
        %v2611 = vmul.f32 1.0, %v2610
        %v2612 = vrcp.pop %v2492
        %v2613 = vmul.f32 1.0, %v2612
        %v2614 = vrcp.pop %v2493
        %v2615 = vmul.f32 1.0, %v2614
        %v2616 = vrcp.pop %v2494
        %v2617 = vmul.f32 1.0, %v2616
        %v2618 = vrcp.pop %v2495
        %v2619 = vmul.f32 1.0, %v2618
        %v2620 = vrcp.pop %v2496
        %v2621 = vmul.f32 1.0, %v2620
        %v2622 = vrcp.pop %v2497
        %v2623 = vmul.f32 1.0, %v2622
        %v2624 = vrcp.pop %v2498
        %v2625 = vmul.f32 1.0, %v2624
        %v2626 = vrcp.pop %v2499
        %v2627 = vmul.f32 1.0, %v2626
        %2628 = vst [vmem:[%s274] sm:$0xff] %v2501
        %2629 = vst [vmem:[%s274 + $0x8] sm:$0xff] %v2503
        %2630 = vst [vmem:[%s274 + $0x10] sm:$0xff] %v2505
        %2631 = vst [vmem:[%s274 + $0x18] sm:$0xff] %v2507
        %2632 = vst [vmem:[%s274 + $0x20] sm:$0xff] %v2509
        %2633 = vst [vmem:[%s274 + $0x28] sm:$0xff] %v2511
        %2634 = vst [vmem:[%s274 + $0x30] sm:$0xff] %v2513
        %2635 = vst [vmem:[%s274 + $0x38] sm:$0xff] %v2515
        %2636 = vst [vmem:[%s274 + $0x40] sm:$0xff] %v2517
        %2637 = vst [vmem:[%s274 + $0x48] sm:$0xff] %v2519
        %2638 = vst [vmem:[%s274 + $0x50] sm:$0xff] %v2521
        %2639 = vst [vmem:[%s274 + $0x58] sm:$0xff] %v2523
        %2640 = vst [vmem:[%s274 + $0x60] sm:$0xff] %v2525
        %2641 = vst [vmem:[%s274 + $0x68] sm:$0xff] %v2527
        %2642 = vst [vmem:[%s274 + $0x70] sm:$0xff] %v2529
        %2643 = vst [vmem:[%s274 + $0x78] sm:$0xff] %v2531
        %2644 = vst [vmem:[%s274 + $0x80] sm:$0xff] %v2533
        %2645 = vst [vmem:[%s274 + $0x88] sm:$0xff] %v2535
        %2646 = vst [vmem:[%s274 + $0x90] sm:$0xff] %v2537
        %2647 = vst [vmem:[%s274 + $0x98] sm:$0xff] %v2539
        %2648 = vst [vmem:[%s274 + $0xa0] sm:$0xff] %v2541
        %2649 = vst [vmem:[%s274 + $0xa8] sm:$0xff] %v2543
        %2650 = vst [vmem:[%s274 + $0xb0] sm:$0xff] %v2545
        %2651 = vst [vmem:[%s274 + $0xb8] sm:$0xff] %v2547
        %2652 = vst [vmem:[%s274 + $0xc0] sm:$0xff] %v2549
        %2653 = vst [vmem:[%s274 + $0xc8] sm:$0xff] %v2551
        %2654 = vst [vmem:[%s274 + $0xd0] sm:$0xff] %v2553
        %2655 = vst [vmem:[%s274 + $0xd8] sm:$0xff] %v2555
        %2656 = vst [vmem:[%s274 + $0xe0] sm:$0xff] %v2557
        %2657 = vst [vmem:[%s274 + $0xe8] sm:$0xff] %v2559
        %2658 = vst [vmem:[%s274 + $0xf0] sm:$0xff] %v2561
        %2659 = vst [vmem:[%s274 + $0xf8] sm:$0xff] %v2563
        %2660 = vst [vmem:[%s274 + $0x100] sm:$0xff] %v2565
        %2661 = vst [vmem:[%s274 + $0x108] sm:$0xff] %v2567
        %2662 = vst [vmem:[%s274 + $0x110] sm:$0xff] %v2569
        %2663 = vst [vmem:[%s274 + $0x118] sm:$0xff] %v2571
        %2664 = vst [vmem:[%s274 + $0x120] sm:$0xff] %v2573
        %2665 = vst [vmem:[%s274 + $0x128] sm:$0xff] %v2575
        %2666 = vst [vmem:[%s274 + $0x130] sm:$0xff] %v2577
        %2667 = vst [vmem:[%s274 + $0x138] sm:$0xff] %v2579
        %2668 = vst [vmem:[%s274 + $0x140] sm:$0xff] %v2581
        %2669 = vst [vmem:[%s274 + $0x148] sm:$0xff] %v2583
        %2670 = vst [vmem:[%s274 + $0x150] sm:$0xff] %v2585
        %2671 = vst [vmem:[%s274 + $0x158] sm:$0xff] %v2587
        %2672 = vst [vmem:[%s274 + $0x160] sm:$0xff] %v2589
        %2673 = vst [vmem:[%s274 + $0x168] sm:$0xff] %v2591
        %2674 = vst [vmem:[%s274 + $0x170] sm:$0xff] %v2593
        %2675 = vst [vmem:[%s274 + $0x178] sm:$0xff] %v2595
        %2676 = vst [vmem:[%s274 + $0x180] sm:$0xff] %v2597
        %2677 = vst [vmem:[%s274 + $0x188] sm:$0xff] %v2599
        %2678 = vst [vmem:[%s274 + $0x190] sm:$0xff] %v2601
        %2679 = vst [vmem:[%s274 + $0x198] sm:$0xff] %v2603
        %2680 = vst [vmem:[%s274 + $0x1a0] sm:$0xff] %v2605
        %2681 = vst [vmem:[%s274 + $0x1a8] sm:$0xff] %v2607
        %2682 = vst [vmem:[%s274 + $0x1b0] sm:$0xff] %v2609
        %2683 = vst [vmem:[%s274 + $0x1b8] sm:$0xff] %v2611
        %2684 = vst [vmem:[%s274 + $0x1c0] sm:$0xff] %v2613
        %2685 = vst [vmem:[%s274 + $0x1c8] sm:$0xff] %v2615
        %2686 = vst [vmem:[%s274 + $0x1d0] sm:$0xff] %v2617
        %2687 = vst [vmem:[%s274 + $0x1d8] sm:$0xff] %v2619
        %2688 = vst [vmem:[%s274 + $0x1e0] sm:$0xff] %v2621
        %2689 = vst [vmem:[%s274 + $0x1e8] sm:$0xff] %v2623
        %2690 = vst [vmem:[%s274 + $0x1f0] sm:$0xff] %v2625
        %2691 = vst [vmem:[%s274 + $0x1f8] sm:$0xff] %v2627
        %s2692 = sand.u32 %s143, 1
        %s2693 = scalar_lea.sflag [#allocation6], %s2692
        %s2694 = sand.u32 %s143, 1
        %s2695 = smul.addr %s2694, 512
        %s2696 = scalar_lea.vmem [#allocation10], %s2695
        // Predicated region
        $region53: #{tpu_custom_call.1} parent=39 // pred_check
          %p2697 = pneg %p153
        $region54: #{tpu_custom_call.1} parent=39 // pred_check_branch
          %2699 = sbr.rel (%p2697) target = $region56
        $region55: #{tpu_custom_call.1} parent=39 // pred_region
          %s2700 = smul.u32 32, %s25
          %s2702 = ssub.s32 8192, 8192
          %2703 = vsyncadd %s2693, %s2702
          %s2704 = smul.addr %s2700, 2
          %s2705 = smul.addr %s2704, 128
          %s2706 = scalar_lea.hbm %s6, %s2705
          %s2707 = sshll.u32 %s2696, 4
          %s2708 = int_to_ptr.vmem [resolvable:$true] %s2707
          %2713 = dma.vmem_to_hbm [thread:$0]  %s2708, 8192, %s2706, %s2693, 256, 256, 16
        $region56: #{tpu_custom_call.1} parent=39 // pred_fallthru
          _
      $region40: #{tpu_custom_call.1} parent=5 // pred_fallthru
        _
      %p2714 = scmp.le.s32.totalorder 2, %s20
      // Predicated region
      $region57: #{tpu_custom_call.1} parent=5 // pred_check
        %p2715 = pneg %p2714
      $region58: #{tpu_custom_call.1} parent=5 // pred_check_branch
        %2717 = sbr.rel (%p2715) target = $region60
      $region59: #{tpu_custom_call.1} parent=5 // pred_region
        %s2718 = ssub.s32 %s20, 2
        // Predicated region
        $region61: #{tpu_custom_call.1} parent=59 // pred_check
          %p2719 = pneg %p159
        $region62: #{tpu_custom_call.1} parent=59 // pred_check_branch
          %2721 = sbr.rel (%p2719) target = $region64
        $region63: #{tpu_custom_call.1} parent=59 // pred_region
          %s2722 = sand.u32 %s144, 1
          %s2723 = scalar_lea.sflag [#allocation6], %s2722
          %s2724 = sand.u32 %s144, 1
          %s2725 = smul.addr %s2724, 512
          %s2726 = scalar_lea.vmem [#allocation10], %s2725
          %2727 = dma.done %s2723, 8192
        $region64: #{tpu_custom_call.1} parent=59 // pred_fallthru
          _
      $region60: #{tpu_custom_call.1} parent=5 // pred_fallthru
        _
    $region6: #{tpu_custom_call.1} parent=1 // loop_footer
      %s24 = sadd.s32 1, %s20
    $region7: #{tpu_custom_call.1} parent=1 // loop_footer_branch
      %19 = sbr.rel target = $region3
    $region8: #{tpu_custom_call.1} parent=1 // loop_exit
      _
    %2728 = vsyncpa [#allocation5], 1
    %s2729 = scalar_lea.sflag [#allocation5], 1
    %2730 = vsyncpa %s2729, 1
    %2731 = vsyncpa [#allocation8], 1
    %2732 = vsyncpa [#allocation6], 1
    %s2733 = scalar_lea.sflag [#allocation6], 1
    %2734 = vsyncpa %s2733, 1

</llo_original>
